<compile_context>
chip_gen: v5e
topology: v5e:2x2
jax: 0.10.0
libtpu: 0.0.40
codegen_flags: <defaults>
</compile_context>

<pallas_src>
import math
import jax
import jax.numpy as jnp
from jax.experimental import pallas as pl
from jax.experimental.pallas import tpu as pltpu

# ---------------- synthetic BERT config (small) ----------------
VOCAB = 128
HIDDEN = 32
N_LAYERS = 2
N_HEADS = 2
HEAD_DIM = HIDDEN // N_HEADS
INTERMEDIATE = 64
MAX_POS = 64
TYPE_VOCAB = 2
NUM_LABELS = 5
HEAD_SIZES = (2, 2, 4, NUM_LABELS, 2)   # offensive, targeted, target_type, multi_label, difficulty
TOTAL_HEAD_OUT = sum(HEAD_SIZES)        # 15
PADDED_HEAD_OUT = 128                   # lane-dense output slab
EPS = 1e-12
FF_PAD = max(HIDDEN, INTERMEDIATE)      # 64 (shared padded FFN weight slab)

# packed per-layer vector slab rows  ([N_LAYERS, LVEC_ROWS, 128], f32)
ROW_BQ = 0                         # rows 0..NH-1   (scale folded in)
ROW_BK = ROW_BQ + N_HEADS          # rows 2..3
ROW_BV = ROW_BK + N_HEADS          # rows 4..5
ROW_BO = ROW_BV + N_HEADS          # row 6
ROW_LN1G, ROW_LN1B = 7, 8
ROW_BI, ROW_BF = 9, 10
ROW_LN2G, ROW_LN2B = 11, 12
LVEC_ROWS = 16

# packed global vector slab rows   ([GVEC_ROWS, 128], f32)
GROW_EMB_LNG, GROW_EMB_LNB, GROW_BP, GROW_HEADS_B = 0, 1, 2, 3
GVEC_ROWS = 8


# ---------------- in-kernel helpers ----------------
def _layernorm(x, g, b):
    mu = jnp.mean(x, axis=-1, keepdims=True)
    var = jnp.mean((x - mu) ** 2, axis=-1, keepdims=True)
    return (x - mu) * jax.lax.rsqrt(var + EPS) * g + b


def _gelu(x):
    # TODO(synk): HF/PyTorch BERT default is exact erf-GELU; tanh approximation used here.
    c = math.sqrt(2.0 / math.pi)
    return 0.5 * x * (1.0 + jnp.tanh(c * (x + 0.044715 * x * x * x)))


def _softmax_last(s):
    s = s - jnp.max(s, axis=-1, keepdims=True)
    e = jnp.exp(s)
    # approx reciprocal -> EUP slot; fine for argmax classification (not bit-exact vs torch).
    return e * pl.reciprocal(jnp.sum(e, axis=-1, keepdims=True), approx=True)


# ---------------- single fused Pallas kernel (no grid, no pipeline) ----------
def bert_forward_kernel(emb_ref, mask_ref, wqkv_ref, wo_ref, wff_ref,
                        lvec_ref, wph_ref, gvec_ref, out_ref):
    B, S, H = emb_ref.shape

    # embeddings layernorm (embedding dropout is identity in eval mode)
    x = _layernorm(emb_ref[...], gvec_ref[GROW_EMB_LNG, :H],
                   gvec_ref[GROW_EMB_LNB, :H])

    # additive mask broadcast hoisted once; reused by every layer / head
    mask_b = mask_ref[...][:, None, :]                           # [B, 1, S]

    for l in range(N_LAYERS):                                    # static; weights resident
        xb = x.reshape(B * S, H).astype(jnp.bfloat16)            # one cast per layer

        # ---- multi-head self-attention.  Per-head weights live on a LEADING
        # ref axis, so there are no lane-offset slices of activations and no
        # lane-axis concat; the output projection is accumulated per head.
        attn = None
        for h in range(N_HEADS):
            # 1/sqrt(HEAD_DIM) is folded into the Q weights/bias at init.
            q = (jnp.dot(xb, wqkv_ref[l, 0 * N_HEADS + h],
                         preferred_element_type=jnp.float32)
                 + lvec_ref[l, ROW_BQ + h, :HEAD_DIM]).reshape(B, S, HEAD_DIM)
            k = (jnp.dot(xb, wqkv_ref[l, 1 * N_HEADS + h],
                         preferred_element_type=jnp.float32)
                 + lvec_ref[l, ROW_BK + h, :HEAD_DIM]).reshape(B, S, HEAD_DIM)
            v = (jnp.dot(xb, wqkv_ref[l, 2 * N_HEADS + h],
                         preferred_element_type=jnp.float32)
                 + lvec_ref[l, ROW_BV + h, :HEAD_DIM]).reshape(B, S, HEAD_DIM)
            # TODO(synk): K is contracted on its last dim -> one tiny implicit
            # relayout per head/layer; kept as the known-good Mosaic einsum form.
            s = jnp.einsum('bqd,bkd->bqk', q, k,
                           preferred_element_type=jnp.float32)
            p = _softmax_last(s + mask_b)
            ctx = jnp.einsum('bqk,bkd->bqd', p, v,
                             preferred_element_type=jnp.float32)
            contrib = jnp.dot(ctx.reshape(B * S, HEAD_DIM).astype(jnp.bfloat16),
                              wo_ref[l, h], preferred_element_type=jnp.float32)
            attn = contrib if attn is None else attn + contrib
        attn = (attn + lvec_ref[l, ROW_BO, :H]).reshape(B, S, H)
        # attention / hidden dropout are identity in eval mode
        x = _layernorm(x + attn, lvec_ref[l, ROW_LN1G, :H],
                       lvec_ref[l, ROW_LN1B, :H])

        # ---- feed-forward
        xb = x.reshape(B * S, H).astype(jnp.bfloat16)
        ff = _gelu(jnp.dot(xb, wff_ref[l, 0, :H, :INTERMEDIATE],
                           preferred_element_type=jnp.float32)
                   + lvec_ref[l, ROW_BI, :INTERMEDIATE])
        ff = (jnp.dot(ff.astype(jnp.bfloat16), wff_ref[l, 1, :INTERMEDIATE, :H],
                      preferred_element_type=jnp.float32)
              + lvec_ref[l, ROW_BF, :H]).reshape(B, S, H)
        x = _layernorm(x + ff, lvec_ref[l, ROW_LN2G, :H],
                       lvec_ref[l, ROW_LN2B, :H])

    # pooler: tanh(dense(hidden[:, 0])); classifier dropout(0.1) identity in eval
    cls = x[:, 0, :]                                             # [B, H] f32
    pooled = jnp.tanh(jnp.dot(cls.astype(jnp.bfloat16), wph_ref[0, :, :H],
                              preferred_element_type=jnp.float32)
                      + gvec_ref[GROW_BP, :H])
    # 5 classification heads fused, zero-padded to a lane-dense 128-wide slab.
    # (B is only 2 here -> partially masked sublane store; keep B a multiple of
    #  8 if batch grows.)
    out_ref[...] = (jnp.dot(pooled.astype(jnp.bfloat16), wph_ref[1],
                            preferred_element_type=jnp.float32)
                    + gvec_ref[GROW_HEADS_B, :])


def pallas_forward(emb, add_mask, p):
    B = emb.shape[0]
    args = (emb, add_mask, p["wqkv"], p["wo"], p["wff"],
            p["lvec"], p["wph"], p["gvec"])
    vmem_spec = pl.BlockSpec(memory_space=pltpu.MemorySpace.VMEM)
    return pl.pallas_call(
        bert_forward_kernel,
        out_shape=jax.ShapeDtypeStruct((B, PADDED_HEAD_OUT), jnp.float32),
        in_specs=[vmem_spec] * len(args),
        out_specs=vmem_spec,
        # explicit scoped-VMEM budget; plenty of headroom at this toy size and
        # valid on v5e / v6e / v7x alike.
        compiler_params=pltpu.CompilerParams(
            vmem_limit_bytes=32 * 1024 * 1024),
    )(*args)


# ---------------- parameter init (deterministic, pre-packed / pre-fused) -----
def init_params(key):
    std = 0.02
    keys = iter(jax.random.split(key, 64))

    def w(shape):
        return jax.random.normal(next(keys), shape, jnp.float32) * std

    scale = 1.0 / math.sqrt(HEAD_DIM)

    def per_head(wmat):                 # [H, H] -> [NH, H, HD]
        return jnp.transpose(wmat.reshape(HIDDEN, N_HEADS, HEAD_DIM), (1, 0, 2))

    wqkv_layers, wo_layers, wff_layers, lvec_layers = [], [], [], []
    for _ in range(N_LAYERS):
        wq = per_head(w((HIDDEN, HIDDEN))) * scale      # attention scale folded into Q
        wk = per_head(w((HIDDEN, HIDDEN)))
        wv = per_head(w((HIDDEN, HIDDEN)))
        wqkv_layers.append(jnp.concatenate([wq, wk, wv], axis=0))   # [3*NH, H, HD]
        # output projection, per head on a leading axis: [NH, HD, H]
        wo_layers.append(w((HIDDEN, HIDDEN)).reshape(N_HEADS, HEAD_DIM, HIDDEN))

        ff = jnp.zeros((2, FF_PAD, FF_PAD), jnp.float32)
        ff = ff.at[0, :HIDDEN, :INTERMEDIATE].set(w((HIDDEN, INTERMEDIATE)))
        ff = ff.at[1, :INTERMEDIATE, :HIDDEN].set(w((INTERMEDIATE, HIDDEN)))
        wff_layers.append(ff)

        lv = jnp.zeros((LVEC_ROWS, 128), jnp.float32)
        # all linear biases start at 0 (BERT init); layernorm gammas = 1
        lv = lv.at[ROW_LN1G, :HIDDEN].set(1.0)
        lv = lv.at[ROW_LN2G, :HIDDEN].set(1.0)
        lvec_layers.append(lv)

    # pooler dense + fused 5-head classifier weight, packed into one slab
    wph = jnp.zeros((2, HIDDEN, PADDED_HEAD_OUT), jnp.float32)
    wph = wph.at[0, :, :HIDDEN].set(w((HIDDEN, HIDDEN)))
    heads_w = jnp.concatenate([w((HIDDEN, n)) for n in HEAD_SIZES], axis=-1)  # [H, 15]
    wph = wph.at[1, :, :TOTAL_HEAD_OUT].set(heads_w)

    gvec = jnp.zeros((GVEC_ROWS, 128), jnp.float32)
    gvec = gvec.at[GROW_EMB_LNG, :HIDDEN].set(1.0)
    # emb_ln_b / pooler bias / fused head bias stay 0

    return {
        "word_emb": w((VOCAB, HIDDEN)),
        "pos_emb": w((MAX_POS, HIDDEN)),
        "type_emb": w((TYPE_VOCAB, HIDDEN)),
        # bf16 weights (halved HBM->VMEM bytes, bf16 MXU path); f32 accumulate.
        "wqkv": jnp.stack(wqkv_layers).astype(jnp.bfloat16),   # [L, 6, H, HD]
        "wo":   jnp.stack(wo_layers).astype(jnp.bfloat16),     # [L, NH, HD, H]
        "wff":  jnp.stack(wff_layers).astype(jnp.bfloat16),    # [L, 2, 64, 64]
        "wph":  wph.astype(jnp.bfloat16),                      # [2, H, 128]
        "lvec": jnp.stack(lvec_layers),                        # [L, 16, 128] f32
        "gvec": gvec,                                          # [8, 128]     f32
    }


# ---------------- forward (embedding gather in JAX, everything else fused) ---
def forward(params, input_ids, attention_mask, token_type_ids=None):
    B, S = input_ids.shape
    if token_type_ids is None:
        token_type_ids = jnp.zeros((B, S), dtype=jnp.int32)

    # embeddings (data-dependent gather is glue); embedding dropout identity in eval mode
    pos = jnp.arange(S, dtype=jnp.int32)
    emb = (params["word_emb"][input_ids]
           + params["pos_emb"][pos][None, :, :]
           + params["type_emb"][token_type_ids]).astype(jnp.float32)

    # additive attention mask (0 keep, -10000 pad)
    add_mask = (1.0 - attention_mask.astype(jnp.float32)) * -10000.0

    logits_padded = pallas_forward(emb, add_mask, params)   # [B, 128]
    logits = logits_padded[:, :TOTAL_HEAD_OUT]              # drop lane padding

    out = {}
    off = 0
    names = ["offensive_logits", "targeted_logits", "target_type_logits",
             "multi_label_logits", "difficulty_logits"]
    for name, n in zip(names, HEAD_SIZES):
        out[name] = logits[:, off:off + n]
        off += n
    return out


if __name__ == "__main__":
    key = jax.random.PRNGKey(0)
    k_ids, k_params = jax.random.split(key)

    B, S = 2, 8
    input_ids = jax.random.randint(k_ids, (B, S), 0, VOCAB, dtype=jnp.int32)
    attention_mask = jnp.ones((B, S), dtype=jnp.int32)

    params = init_params(k_params)
    out = forward(params, input_ids, attention_mask)
    out = jax.block_until_ready(out)

    assert out["offensive_logits"].shape == (B, 2)
    assert out["targeted_logits"].shape == (B, 2)
    assert out["target_type_logits"].shape == (B, 4)
    assert out["multi_label_logits"].shape == (B, NUM_LABELS)
    assert out["difficulty_logits"].shape == (B, 2)
    print("KERNEL_OK")
</pallas_src>

<mosaic_0001>
module attributes {stable_mosaic.version = 11 : i64} {
  func.func @bert_forward_kernel(%arg0: memref<2x8x32xf32, #tpu.memory_space<vmem>>, %arg1: memref<2x8xf32, #tpu.memory_space<vmem>>, %arg2: memref<2x6x32x16xbf16, #tpu.memory_space<vmem>>, %arg3: memref<2x2x16x32xbf16, #tpu.memory_space<vmem>>, %arg4: memref<2x2x64x64xbf16, #tpu.memory_space<vmem>>, %arg5: memref<2x16x128xf32, #tpu.memory_space<vmem>>, %arg6: memref<2x32x128xbf16, #tpu.memory_space<vmem>>, %arg7: memref<8x128xf32, #tpu.memory_space<vmem>>, %arg8: memref<2x128xf32, #tpu.memory_space<vmem>>) attributes {dimension_semantics = [], scalar_prefetch = 0 : i64, scratch_operands = 0 : i64, tpu.core_type = #tpu.core_type<tc>} {
    %c0 = arith.constant 0 : index
    %c0_0 = arith.constant 0 : index
    %c0_1 = arith.constant 0 : index
    %0 = vector.load %arg0[%c0, %c0_0, %c0_1] : memref<2x8x32xf32, #tpu.memory_space<vmem>>, vector<2x8x32xf32>
    %c0_2 = arith.constant 0 : index
    %c0_3 = arith.constant 0 : index
    %1 = vector.load %arg7[%c0_2, %c0_3] : memref<8x128xf32, #tpu.memory_space<vmem>>, vector<1x32xf32>
    %2 = vector.shape_cast %1 : vector<1x32xf32> to vector<32xf32>
    %c1 = arith.constant 1 : index
    %c0_4 = arith.constant 0 : index
    %3 = vector.load %arg7[%c1, %c0_4] : memref<8x128xf32, #tpu.memory_space<vmem>>, vector<1x32xf32>
    %4 = vector.shape_cast %3 : vector<1x32xf32> to vector<32xf32>
    %cst = arith.constant dense<0.000000e+00> : vector<2x8xf32>
    %5 = vector.multi_reduction <add>, %0, %cst [2] : vector<2x8x32xf32> to vector<2x8xf32>
    %6 = vector.shape_cast %5 : vector<2x8xf32> to vector<2x8x1xf32>
    %cst_5 = arith.constant 3.200000e+01 : f32
    %7 = vector.broadcast %cst_5 : f32 to vector<2x8x1xf32>
    %8 = arith.divf %6, %7 : vector<2x8x1xf32>
    %9 = vector.broadcast %8 : vector<2x8x1xf32> to vector<2x8x32xf32>
    %10 = arith.subf %0, %9 : vector<2x8x32xf32>
    %11 = arith.mulf %10, %10 : vector<2x8x32xf32>
    %cst_6 = arith.constant dense<0.000000e+00> : vector<2x8xf32>
    %12 = vector.multi_reduction <add>, %11, %cst_6 [2] : vector<2x8x32xf32> to vector<2x8xf32>
    %13 = vector.shape_cast %12 : vector<2x8xf32> to vector<2x8x1xf32>
    %cst_7 = arith.constant 3.200000e+01 : f32
    %14 = vector.broadcast %cst_7 : f32 to vector<2x8x1xf32>
    %15 = arith.divf %13, %14 : vector<2x8x1xf32>
    %16 = vector.broadcast %8 : vector<2x8x1xf32> to vector<2x8x32xf32>
    %17 = arith.subf %0, %16 : vector<2x8x32xf32>
    %cst_8 = arith.constant 9.99999996E-13 : f32
    %18 = vector.broadcast %cst_8 : f32 to vector<2x8x1xf32>
    %19 = arith.addf %15, %18 : vector<2x8x1xf32>
    %20 = math.rsqrt %19 : vector<2x8x1xf32>
    %21 = vector.broadcast %20 : vector<2x8x1xf32> to vector<2x8x32xf32>
    %22 = arith.mulf %17, %21 : vector<2x8x32xf32>
    %23 = vector.shape_cast %2 : vector<32xf32> to vector<1x1x32xf32>
    %24 = vector.broadcast %23 : vector<1x1x32xf32> to vector<2x8x32xf32>
    %25 = arith.mulf %22, %24 : vector<2x8x32xf32>
    %26 = vector.shape_cast %4 : vector<32xf32> to vector<1x1x32xf32>
    %27 = vector.broadcast %26 : vector<1x1x32xf32> to vector<2x8x32xf32>
    %28 = arith.addf %25, %27 : vector<2x8x32xf32>
    %c0_9 = arith.constant 0 : index
    %c0_10 = arith.constant 0 : index
    %29 = vector.load %arg1[%c0_9, %c0_10] : memref<2x8xf32, #tpu.memory_space<vmem>>, vector<2x8xf32>
    %30 = vector.shape_cast %29 : vector<2x8xf32> to vector<2x1x8xf32>
    %31 = vector.shape_cast %28 : vector<2x8x32xf32> to vector<16x32xf32>
    %32 = arith.truncf %31 : vector<16x32xf32> to vector<16x32xbf16>
    %c0_11 = arith.constant 0 : index
    %c0_12 = arith.constant 0 : index
    %c0_13 = arith.constant 0 : index
    %c0_14 = arith.constant 0 : index
    %33 = vector.load %arg2[%c0_11, %c0_12, %c0_13, %c0_14] : memref<2x6x32x16xbf16, #tpu.memory_space<vmem>>, vector<1x1x32x16xbf16>
    %34 = vector.shape_cast %33 : vector<1x1x32x16xbf16> to vector<32x16xbf16>
    %cst_15 = arith.constant dense<0.000000e+00> : vector<16x16xf32>
    %35 = tpu.matmul %32, %34, %cst_15 {dimension_numbers = #tpu.dot_dimension_numbers<[1], [0], [0], [1], [0, 0, 1, 1], [], []>} : vector<16x32xbf16>, vector<32x16xbf16>, vector<16x16xf32> -> vector<16x16xf32>
    %c0_16 = arith.constant 0 : index
    %c0_17 = arith.constant 0 : index
    %c0_18 = arith.constant 0 : index
    %36 = vector.load %arg5[%c0_16, %c0_17, %c0_18] : memref<2x16x128xf32, #tpu.memory_space<vmem>>, vector<1x1x16xf32>
    %37 = vector.shape_cast %36 : vector<1x1x16xf32> to vector<16xf32>
    %38 = vector.shape_cast %37 : vector<16xf32> to vector<1x16xf32>
    %39 = vector.broadcast %38 : vector<1x16xf32> to vector<16x16xf32>
    %40 = arith.addf %35, %39 : vector<16x16xf32>
    %41 = vector.shape_cast %40 : vector<16x16xf32> to vector<2x8x16xf32>
    %c0_19 = arith.constant 0 : index
    %c2 = arith.constant 2 : index
    %c0_20 = arith.constant 0 : index
    %c0_21 = arith.constant 0 : index
    %42 = vector.load %arg2[%c0_19, %c2, %c0_20, %c0_21] : memref<2x6x32x16xbf16, #tpu.memory_space<vmem>>, vector<1x1x32x16xbf16>
    %43 = vector.shape_cast %42 : vector<1x1x32x16xbf16> to vector<32x16xbf16>
    %cst_22 = arith.constant dense<0.000000e+00> : vector<16x16xf32>
    %44 = tpu.matmul %32, %43, %cst_22 {dimension_numbers = #tpu.dot_dimension_numbers<[1], [0], [0], [1], [0, 0, 1, 1], [], []>} : vector<16x32xbf16>, vector<32x16xbf16>, vector<16x16xf32> -> vector<16x16xf32>
    %c0_23 = arith.constant 0 : index
    %c2_24 = arith.constant 2 : index
    %c0_25 = arith.constant 0 : index
    %45 = vector.load %arg5[%c0_23, %c2_24, %c0_25] : memref<2x16x128xf32, #tpu.memory_space<vmem>>, vector<1x1x16xf32>
    %46 = vector.shape_cast %45 : vector<1x1x16xf32> to vector<16xf32>
    %47 = vector.shape_cast %46 : vector<16xf32> to vector<1x16xf32>
    %48 = vector.broadcast %47 : vector<1x16xf32> to vector<16x16xf32>
    %49 = arith.addf %44, %48 : vector<16x16xf32>
    %50 = vector.shape_cast %49 : vector<16x16xf32> to vector<2x8x16xf32>
    %c0_26 = arith.constant 0 : index
    %c4 = arith.constant 4 : index
    %c0_27 = arith.constant 0 : index
    %c0_28 = arith.constant 0 : index
    %51 = vector.load %arg2[%c0_26, %c4, %c0_27, %c0_28] : memref<2x6x32x16xbf16, #tpu.memory_space<vmem>>, vector<1x1x32x16xbf16>
    %52 = vector.shape_cast %51 : vector<1x1x32x16xbf16> to vector<32x16xbf16>
    %cst_29 = arith.constant dense<0.000000e+00> : vector<16x16xf32>
    %53 = tpu.matmul %32, %52, %cst_29 {dimension_numbers = #tpu.dot_dimension_numbers<[1], [0], [0], [1], [0, 0, 1, 1], [], []>} : vector<16x32xbf16>, vector<32x16xbf16>, vector<16x16xf32> -> vector<16x16xf32>
    %c0_30 = arith.constant 0 : index
    %c4_31 = arith.constant 4 : index
    %c0_32 = arith.constant 0 : index
    %54 = vector.load %arg5[%c0_30, %c4_31, %c0_32] : memref<2x16x128xf32, #tpu.memory_space<vmem>>, vector<1x1x16xf32>
    %55 = vector.shape_cast %54 : vector<1x1x16xf32> to vector<16xf32>
    %56 = vector.shape_cast %55 : vector<16xf32> to vector<1x16xf32>
    %57 = vector.broadcast %56 : vector<1x16xf32> to vector<16x16xf32>
    %58 = arith.addf %53, %57 : vector<16x16xf32>
    %59 = vector.shape_cast %58 : vector<16x16xf32> to vector<2x8x16xf32>
    "tpu.trace_start"() <{level = 10 : i32, message = "bqd,bkd->bqk"}> : () -> ()
    %cst_33 = arith.constant dense<0.000000e+00> : vector<2x8x8xf32>
    %60 = tpu.matmul %41, %50, %cst_33 {dimension_numbers = #tpu.dot_dimension_numbers<[2], [2], [1], [1], [0, 0, 0, 1, 1, 1], [0], [0]>} : vector<2x8x16xf32>, vector<2x8x16xf32>, vector<2x8x8xf32> -> vector<2x8x8xf32>
    "tpu.trace_stop"() : () -> ()
    %61 = vector.broadcast %30 : vector<2x1x8xf32> to vector<2x8x8xf32>
    %62 = arith.addf %60, %61 : vector<2x8x8xf32>
    %cst_34 = arith.constant dense<0xFF800000> : vector<2x8xf32>
    %63 = vector.multi_reduction <maximumf>, %62, %cst_34 [2] : vector<2x8x8xf32> to vector<2x8xf32>
    %64 = vector.shape_cast %63 : vector<2x8xf32> to vector<2x8x1xf32>
    %65 = vector.broadcast %64 : vector<2x8x1xf32> to vector<2x8x8xf32>
    %66 = arith.subf %62, %65 : vector<2x8x8xf32>
    %67 = math.exp %66 : vector<2x8x8xf32>
    %cst_35 = arith.constant dense<0.000000e+00> : vector<2x8xf32>
    %68 = vector.multi_reduction <add>, %67, %cst_35 [2] : vector<2x8x8xf32> to vector<2x8xf32>
    %69 = vector.shape_cast %68 : vector<2x8xf32> to vector<2x8x1xf32>
    %70 = tpu.reciprocal %69 {approx = true} : vector<2x8x1xf32> -> vector<2x8x1xf32>
    %71 = vector.broadcast %70 : vector<2x8x1xf32> to vector<2x8x8xf32>
    %72 = arith.mulf %67, %71 : vector<2x8x8xf32>
    "tpu.trace_start"() <{level = 10 : i32, message = "bqk,bkd->bqd"}> : () -> ()
    %cst_36 = arith.constant dense<0.000000e+00> : vector<2x8x16xf32>
    %73 = tpu.matmul %72, %59, %cst_36 {dimension_numbers = #tpu.dot_dimension_numbers<[2], [1], [1], [2], [0, 0, 0, 1, 1, 2], [0], [0]>} : vector<2x8x8xf32>, vector<2x8x16xf32>, vector<2x8x16xf32> -> vector<2x8x16xf32>
    "tpu.trace_stop"() : () -> ()
    %74 = vector.shape_cast %73 : vector<2x8x16xf32> to vector<16x16xf32>
    %75 = arith.truncf %74 : vector<16x16xf32> to vector<16x16xbf16>
    %c0_37 = arith.constant 0 : index
    %c0_38 = arith.constant 0 : index
    %c0_39 = arith.constant 0 : index
    %c0_40 = arith.constant 0 : index
    %76 = vector.load %arg3[%c0_37, %c0_38, %c0_39, %c0_40] : memref<2x2x16x32xbf16, #tpu.memory_space<vmem>>, vector<1x1x16x32xbf16>
    %77 = vector.shape_cast %76 : vector<1x1x16x32xbf16> to vector<16x32xbf16>
    %cst_41 = arith.constant dense<0.000000e+00> : vector<16x32xf32>
    %78 = tpu.matmul %75, %77, %cst_41 {dimension_numbers = #tpu.dot_dimension_numbers<[1], [0], [0], [1], [0, 0, 1, 1], [], []>} : vector<16x16xbf16>, vector<16x32xbf16>, vector<16x32xf32> -> vector<16x32xf32>
    %c0_42 = arith.constant 0 : index
    %c1_43 = arith.constant 1 : index
    %c0_44 = arith.constant 0 : index
    %c0_45 = arith.constant 0 : index
    %79 = vector.load %arg2[%c0_42, %c1_43, %c0_44, %c0_45] : memref<2x6x32x16xbf16, #tpu.memory_space<vmem>>, vector<1x1x32x16xbf16>
    %80 = vector.shape_cast %79 : vector<1x1x32x16xbf16> to vector<32x16xbf16>
    %cst_46 = arith.constant dense<0.000000e+00> : vector<16x16xf32>
    %81 = tpu.matmul %32, %80, %cst_46 {dimension_numbers = #tpu.dot_dimension_numbers<[1], [0], [0], [1], [0, 0, 1, 1], [], []>} : vector<16x32xbf16>, vector<32x16xbf16>, vector<16x16xf32> -> vector<16x16xf32>
    %c0_47 = arith.constant 0 : index
    %c1_48 = arith.constant 1 : index
    %c0_49 = arith.constant 0 : index
    %82 = vector.load %arg5[%c0_47, %c1_48, %c0_49] : memref<2x16x128xf32, #tpu.memory_space<vmem>>, vector<1x1x16xf32>
    %83 = vector.shape_cast %82 : vector<1x1x16xf32> to vector<16xf32>
    %84 = vector.shape_cast %83 : vector<16xf32> to vector<1x16xf32>
    %85 = vector.broadcast %84 : vector<1x16xf32> to vector<16x16xf32>
    %86 = arith.addf %81, %85 : vector<16x16xf32>
    %87 = vector.shape_cast %86 : vector<16x16xf32> to vector<2x8x16xf32>
    %c0_50 = arith.constant 0 : index
    %c3 = arith.constant 3 : index
    %c0_51 = arith.constant 0 : index
    %c0_52 = arith.constant 0 : index
    %88 = vector.load %arg2[%c0_50, %c3, %c0_51, %c0_52] : memref<2x6x32x16xbf16, #tpu.memory_space<vmem>>, vector<1x1x32x16xbf16>
    %89 = vector.shape_cast %88 : vector<1x1x32x16xbf16> to vector<32x16xbf16>
    %cst_53 = arith.constant dense<0.000000e+00> : vector<16x16xf32>
    %90 = tpu.matmul %32, %89, %cst_53 {dimension_numbers = #tpu.dot_dimension_numbers<[1], [0], [0], [1], [0, 0, 1, 1], [], []>} : vector<16x32xbf16>, vector<32x16xbf16>, vector<16x16xf32> -> vector<16x16xf32>
    %c0_54 = arith.constant 0 : index
    %c3_55 = arith.constant 3 : index
    %c0_56 = arith.constant 0 : index
    %91 = vector.load %arg5[%c0_54, %c3_55, %c0_56] : memref<2x16x128xf32, #tpu.memory_space<vmem>>, vector<1x1x16xf32>
    %92 = vector.shape_cast %91 : vector<1x1x16xf32> to vector<16xf32>
    %93 = vector.shape_cast %92 : vector<16xf32> to vector<1x16xf32>
    %94 = vector.broadcast %93 : vector<1x16xf32> to vector<16x16xf32>
    %95 = arith.addf %90, %94 : vector<16x16xf32>
    %96 = vector.shape_cast %95 : vector<16x16xf32> to vector<2x8x16xf32>
    %c0_57 = arith.constant 0 : index
    %c5 = arith.constant 5 : index
    %c0_58 = arith.constant 0 : index
    %c0_59 = arith.constant 0 : index
    %97 = vector.load %arg2[%c0_57, %c5, %c0_58, %c0_59] : memref<2x6x32x16xbf16, #tpu.memory_space<vmem>>, vector<1x1x32x16xbf16>
    %98 = vector.shape_cast %97 : vector<1x1x32x16xbf16> to vector<32x16xbf16>
    %cst_60 = arith.constant dense<0.000000e+00> : vector<16x16xf32>
    %99 = tpu.matmul %32, %98, %cst_60 {dimension_numbers = #tpu.dot_dimension_numbers<[1], [0], [0], [1], [0, 0, 1, 1], [], []>} : vector<16x32xbf16>, vector<32x16xbf16>, vector<16x16xf32> -> vector<16x16xf32>
    %c0_61 = arith.constant 0 : index
    %c5_62 = arith.constant 5 : index
    %c0_63 = arith.constant 0 : index
    %100 = vector.load %arg5[%c0_61, %c5_62, %c0_63] : memref<2x16x128xf32, #tpu.memory_space<vmem>>, vector<1x1x16xf32>
    %101 = vector.shape_cast %100 : vector<1x1x16xf32> to vector<16xf32>
    %102 = vector.shape_cast %101 : vector<16xf32> to vector<1x16xf32>
    %103 = vector.broadcast %102 : vector<1x16xf32> to vector<16x16xf32>
    %104 = arith.addf %99, %103 : vector<16x16xf32>
    %105 = vector.shape_cast %104 : vector<16x16xf32> to vector<2x8x16xf32>
    "tpu.trace_start"() <{level = 10 : i32, message = "bqd,bkd->bqk"}> : () -> ()
    %cst_64 = arith.constant dense<0.000000e+00> : vector<2x8x8xf32>
    %106 = tpu.matmul %87, %96, %cst_64 {dimension_numbers = #tpu.dot_dimension_numbers<[2], [2], [1], [1], [0, 0, 0, 1, 1, 1], [0], [0]>} : vector<2x8x16xf32>, vector<2x8x16xf32>, vector<2x8x8xf32> -> vector<2x8x8xf32>
    "tpu.trace_stop"() : () -> ()
    %107 = vector.broadcast %30 : vector<2x1x8xf32> to vector<2x8x8xf32>
    %108 = arith.addf %106, %107 : vector<2x8x8xf32>
    %cst_65 = arith.constant dense<0xFF800000> : vector<2x8xf32>
    %109 = vector.multi_reduction <maximumf>, %108, %cst_65 [2] : vector<2x8x8xf32> to vector<2x8xf32>
    %110 = vector.shape_cast %109 : vector<2x8xf32> to vector<2x8x1xf32>
    %111 = vector.broadcast %110 : vector<2x8x1xf32> to vector<2x8x8xf32>
    %112 = arith.subf %108, %111 : vector<2x8x8xf32>
    %113 = math.exp %112 : vector<2x8x8xf32>
    %cst_66 = arith.constant dense<0.000000e+00> : vector<2x8xf32>
    %114 = vector.multi_reduction <add>, %113, %cst_66 [2] : vector<2x8x8xf32> to vector<2x8xf32>
    %115 = vector.shape_cast %114 : vector<2x8xf32> to vector<2x8x1xf32>
    %116 = tpu.reciprocal %115 {approx = true} : vector<2x8x1xf32> -> vector<2x8x1xf32>
    %117 = vector.broadcast %116 : vector<2x8x1xf32> to vector<2x8x8xf32>
    %118 = arith.mulf %113, %117 : vector<2x8x8xf32>
    "tpu.trace_start"() <{level = 10 : i32, message = "bqk,bkd->bqd"}> : () -> ()
    %cst_67 = arith.constant dense<0.000000e+00> : vector<2x8x16xf32>
    %119 = tpu.matmul %118, %105, %cst_67 {dimension_numbers = #tpu.dot_dimension_numbers<[2], [1], [1], [2], [0, 0, 0, 1, 1, 2], [0], [0]>} : vector<2x8x8xf32>, vector<2x8x16xf32>, vector<2x8x16xf32> -> vector<2x8x16xf32>
    "tpu.trace_stop"() : () -> ()
    %120 = vector.shape_cast %119 : vector<2x8x16xf32> to vector<16x16xf32>
    %121 = arith.truncf %120 : vector<16x16xf32> to vector<16x16xbf16>
    %c0_68 = arith.constant 0 : index
    %c1_69 = arith.constant 1 : index
    %c0_70 = arith.constant 0 : index
    %c0_71 = arith.constant 0 : index
    %122 = vector.load %arg3[%c0_68, %c1_69, %c0_70, %c0_71] : memref<2x2x16x32xbf16, #tpu.memory_space<vmem>>, vector<1x1x16x32xbf16>
    %123 = vector.shape_cast %122 : vector<1x1x16x32xbf16> to vector<16x32xbf16>
    %cst_72 = arith.constant dense<0.000000e+00> : vector<16x32xf32>
    %124 = tpu.matmul %121, %123, %cst_72 {dimension_numbers = #tpu.dot_dimension_numbers<[1], [0], [0], [1], [0, 0, 1, 1], [], []>} : vector<16x16xbf16>, vector<16x32xbf16>, vector<16x32xf32> -> vector<16x32xf32>
    %125 = arith.addf %78, %124 : vector<16x32xf32>
    %c0_73 = arith.constant 0 : index
    %c6 = arith.constant 6 : index
    %c0_74 = arith.constant 0 : index
    %126 = vector.load %arg5[%c0_73, %c6, %c0_74] : memref<2x16x128xf32, #tpu.memory_space<vmem>>, vector<1x1x32xf32>
    %127 = vector.shape_cast %126 : vector<1x1x32xf32> to vector<32xf32>
    %128 = vector.shape_cast %127 : vector<32xf32> to vector<1x32xf32>
    %129 = vector.broadcast %128 : vector<1x32xf32> to vector<16x32xf32>
    %130 = arith.addf %125, %129 : vector<16x32xf32>
    %131 = vector.shape_cast %130 : vector<16x32xf32> to vector<2x8x32xf32>
    %132 = arith.addf %28, %131 : vector<2x8x32xf32>
    %c0_75 = arith.constant 0 : index
    %c7 = arith.constant 7 : index
    %c0_76 = arith.constant 0 : index
    %133 = vector.load %arg5[%c0_75, %c7, %c0_76] : memref<2x16x128xf32, #tpu.memory_space<vmem>>, vector<1x1x32xf32>
    %134 = vector.shape_cast %133 : vector<1x1x32xf32> to vector<32xf32>
    %c0_77 = arith.constant 0 : index
    %c8 = arith.constant 8 : index
    %c0_78 = arith.constant 0 : index
    %135 = vector.load %arg5[%c0_77, %c8, %c0_78] : memref<2x16x128xf32, #tpu.memory_space<vmem>>, vector<1x1x32xf32>
    %136 = vector.shape_cast %135 : vector<1x1x32xf32> to vector<32xf32>
    %cst_79 = arith.constant dense<0.000000e+00> : vector<2x8xf32>
    %137 = vector.multi_reduction <add>, %132, %cst_79 [2] : vector<2x8x32xf32> to vector<2x8xf32>
    %138 = vector.shape_cast %137 : vector<2x8xf32> to vector<2x8x1xf32>
    %cst_80 = arith.constant 3.200000e+01 : f32
    %139 = vector.broadcast %cst_80 : f32 to vector<2x8x1xf32>
    %140 = arith.divf %138, %139 : vector<2x8x1xf32>
    %141 = vector.broadcast %140 : vector<2x8x1xf32> to vector<2x8x32xf32>
    %142 = arith.subf %132, %141 : vector<2x8x32xf32>
    %143 = arith.mulf %142, %142 : vector<2x8x32xf32>
    %cst_81 = arith.constant dense<0.000000e+00> : vector<2x8xf32>
    %144 = vector.multi_reduction <add>, %143, %cst_81 [2] : vector<2x8x32xf32> to vector<2x8xf32>
    %145 = vector.shape_cast %144 : vector<2x8xf32> to vector<2x8x1xf32>
    %cst_82 = arith.constant 3.200000e+01 : f32
    %146 = vector.broadcast %cst_82 : f32 to vector<2x8x1xf32>
    %147 = arith.divf %145, %146 : vector<2x8x1xf32>
    %148 = vector.broadcast %140 : vector<2x8x1xf32> to vector<2x8x32xf32>
    %149 = arith.subf %132, %148 : vector<2x8x32xf32>
    %cst_83 = arith.constant 9.99999996E-13 : f32
    %150 = vector.broadcast %cst_83 : f32 to vector<2x8x1xf32>
    %151 = arith.addf %147, %150 : vector<2x8x1xf32>
    %152 = math.rsqrt %151 : vector<2x8x1xf32>
    %153 = vector.broadcast %152 : vector<2x8x1xf32> to vector<2x8x32xf32>
    %154 = arith.mulf %149, %153 : vector<2x8x32xf32>
    %155 = vector.shape_cast %134 : vector<32xf32> to vector<1x1x32xf32>
    %156 = vector.broadcast %155 : vector<1x1x32xf32> to vector<2x8x32xf32>
    %157 = arith.mulf %154, %156 : vector<2x8x32xf32>
    %158 = vector.shape_cast %136 : vector<32xf32> to vector<1x1x32xf32>
    %159 = vector.broadcast %158 : vector<1x1x32xf32> to vector<2x8x32xf32>
    %160 = arith.addf %157, %159 : vector<2x8x32xf32>
    %161 = vector.shape_cast %160 : vector<2x8x32xf32> to vector<16x32xf32>
    %162 = arith.truncf %161 : vector<16x32xf32> to vector<16x32xbf16>
    %c0_84 = arith.constant 0 : index
    %c0_85 = arith.constant 0 : index
    %c0_86 = arith.constant 0 : index
    %c0_87 = arith.constant 0 : index
    %163 = vector.load %arg4[%c0_84, %c0_85, %c0_86, %c0_87] : memref<2x2x64x64xbf16, #tpu.memory_space<vmem>>, vector<1x1x32x64xbf16>
    %164 = vector.shape_cast %163 : vector<1x1x32x64xbf16> to vector<32x64xbf16>
    %cst_88 = arith.constant dense<0.000000e+00> : vector<16x64xf32>
    %165 = tpu.matmul %162, %164, %cst_88 {dimension_numbers = #tpu.dot_dimension_numbers<[1], [0], [0], [1], [0, 0, 1, 1], [], []>} : vector<16x32xbf16>, vector<32x64xbf16>, vector<16x64xf32> -> vector<16x64xf32>
    %c0_89 = arith.constant 0 : index
    %c9 = arith.constant 9 : index
    %c0_90 = arith.constant 0 : index
    %166 = vector.load %arg5[%c0_89, %c9, %c0_90] : memref<2x16x128xf32, #tpu.memory_space<vmem>>, vector<1x1x64xf32>
    %167 = vector.shape_cast %166 : vector<1x1x64xf32> to vector<64xf32>
    %168 = vector.shape_cast %167 : vector<64xf32> to vector<1x64xf32>
    %169 = vector.broadcast %168 : vector<1x64xf32> to vector<16x64xf32>
    %170 = arith.addf %165, %169 : vector<16x64xf32>
    %cst_91 = arith.constant 5.000000e-01 : f32
    %171 = vector.broadcast %cst_91 : f32 to vector<16x64xf32>
    %172 = arith.mulf %171, %170 : vector<16x64xf32>
    %cst_92 = arith.constant 4.471500e-02 : f32
    %173 = vector.broadcast %cst_92 : f32 to vector<16x64xf32>
    %174 = arith.mulf %173, %170 : vector<16x64xf32>
    %175 = arith.mulf %174, %170 : vector<16x64xf32>
    %176 = arith.mulf %175, %170 : vector<16x64xf32>
    %177 = arith.addf %170, %176 : vector<16x64xf32>
    %cst_93 = arith.constant 0.797884583 : f32
    %178 = vector.broadcast %cst_93 : f32 to vector<16x64xf32>
    %179 = arith.mulf %178, %177 : vector<16x64xf32>
    %180 = math.tanh %179 : vector<16x64xf32>
    %cst_94 = arith.constant 1.000000e+00 : f32
    %181 = vector.broadcast %cst_94 : f32 to vector<16x64xf32>
    %182 = arith.addf %181, %180 : vector<16x64xf32>
    %183 = arith.mulf %172, %182 : vector<16x64xf32>
    %184 = arith.truncf %183 : vector<16x64xf32> to vector<16x64xbf16>
    %c0_95 = arith.constant 0 : index
    %c1_96 = arith.constant 1 : index
    %c0_97 = arith.constant 0 : index
    %c0_98 = arith.constant 0 : index
    %185 = vector.load %arg4[%c0_95, %c1_96, %c0_97, %c0_98] : memref<2x2x64x64xbf16, #tpu.memory_space<vmem>>, vector<1x1x64x32xbf16>
    %186 = vector.shape_cast %185 : vector<1x1x64x32xbf16> to vector<64x32xbf16>
    %cst_99 = arith.constant dense<0.000000e+00> : vector<16x32xf32>
    %187 = tpu.matmul %184, %186, %cst_99 {dimension_numbers = #tpu.dot_dimension_numbers<[1], [0], [0], [1], [0, 0, 1, 1], [], []>} : vector<16x64xbf16>, vector<64x32xbf16>, vector<16x32xf32> -> vector<16x32xf32>
    %c0_100 = arith.constant 0 : index
    %c10 = arith.constant 10 : index
    %c0_101 = arith.constant 0 : index
    %188 = vector.load %arg5[%c0_100, %c10, %c0_101] : memref<2x16x128xf32, #tpu.memory_space<vmem>>, vector<1x1x32xf32>
    %189 = vector.shape_cast %188 : vector<1x1x32xf32> to vector<32xf32>
    %190 = vector.shape_cast %189 : vector<32xf32> to vector<1x32xf32>
    %191 = vector.broadcast %190 : vector<1x32xf32> to vector<16x32xf32>
    %192 = arith.addf %187, %191 : vector<16x32xf32>
    %193 = vector.shape_cast %192 : vector<16x32xf32> to vector<2x8x32xf32>
    %194 = arith.addf %160, %193 : vector<2x8x32xf32>
    %c0_102 = arith.constant 0 : index
    %c11 = arith.constant 11 : index
    %c0_103 = arith.constant 0 : index
    %195 = vector.load %arg5[%c0_102, %c11, %c0_103] : memref<2x16x128xf32, #tpu.memory_space<vmem>>, vector<1x1x32xf32>
    %196 = vector.shape_cast %195 : vector<1x1x32xf32> to vector<32xf32>
    %c0_104 = arith.constant 0 : index
    %c12 = arith.constant 12 : index
    %c0_105 = arith.constant 0 : index
    %197 = vector.load %arg5[%c0_104, %c12, %c0_105] : memref<2x16x128xf32, #tpu.memory_space<vmem>>, vector<1x1x32xf32>
    %198 = vector.shape_cast %197 : vector<1x1x32xf32> to vector<32xf32>
    %cst_106 = arith.constant dense<0.000000e+00> : vector<2x8xf32>
    %199 = vector.multi_reduction <add>, %194, %cst_106 [2] : vector<2x8x32xf32> to vector<2x8xf32>
    %200 = vector.shape_cast %199 : vector<2x8xf32> to vector<2x8x1xf32>
    %cst_107 = arith.constant 3.200000e+01 : f32
    %201 = vector.broadcast %cst_107 : f32 to vector<2x8x1xf32>
    %202 = arith.divf %200, %201 : vector<2x8x1xf32>
    %203 = vector.broadcast %202 : vector<2x8x1xf32> to vector<2x8x32xf32>
    %204 = arith.subf %194, %203 : vector<2x8x32xf32>
    %205 = arith.mulf %204, %204 : vector<2x8x32xf32>
    %cst_108 = arith.constant dense<0.000000e+00> : vector<2x8xf32>
    %206 = vector.multi_reduction <add>, %205, %cst_108 [2] : vector<2x8x32xf32> to vector<2x8xf32>
    %207 = vector.shape_cast %206 : vector<2x8xf32> to vector<2x8x1xf32>
    %cst_109 = arith.constant 3.200000e+01 : f32
    %208 = vector.broadcast %cst_109 : f32 to vector<2x8x1xf32>
    %209 = arith.divf %207, %208 : vector<2x8x1xf32>
    %210 = vector.broadcast %202 : vector<2x8x1xf32> to vector<2x8x32xf32>
    %211 = arith.subf %194, %210 : vector<2x8x32xf32>
    %cst_110 = arith.constant 9.99999996E-13 : f32
    %212 = vector.broadcast %cst_110 : f32 to vector<2x8x1xf32>
    %213 = arith.addf %209, %212 : vector<2x8x1xf32>
    %214 = math.rsqrt %213 : vector<2x8x1xf32>
    %215 = vector.broadcast %214 : vector<2x8x1xf32> to vector<2x8x32xf32>
    %216 = arith.mulf %211, %215 : vector<2x8x32xf32>
    %217 = vector.shape_cast %196 : vector<32xf32> to vector<1x1x32xf32>
    %218 = vector.broadcast %217 : vector<1x1x32xf32> to vector<2x8x32xf32>
    %219 = arith.mulf %216, %218 : vector<2x8x32xf32>
    %220 = vector.shape_cast %198 : vector<32xf32> to vector<1x1x32xf32>
    %221 = vector.broadcast %220 : vector<1x1x32xf32> to vector<2x8x32xf32>
    %222 = arith.addf %219, %221 : vector<2x8x32xf32>
    %223 = vector.shape_cast %222 : vector<2x8x32xf32> to vector<16x32xf32>
    %224 = arith.truncf %223 : vector<16x32xf32> to vector<16x32xbf16>
    %c1_111 = arith.constant 1 : index
    %c0_112 = arith.constant 0 : index
    %c0_113 = arith.constant 0 : index
    %c0_114 = arith.constant 0 : index
    %225 = vector.load %arg2[%c1_111, %c0_112, %c0_113, %c0_114] : memref<2x6x32x16xbf16, #tpu.memory_space<vmem>>, vector<1x1x32x16xbf16>
    %226 = vector.shape_cast %225 : vector<1x1x32x16xbf16> to vector<32x16xbf16>
    %cst_115 = arith.constant dense<0.000000e+00> : vector<16x16xf32>
    %227 = tpu.matmul %224, %226, %cst_115 {dimension_numbers = #tpu.dot_dimension_numbers<[1], [0], [0], [1], [0, 0, 1, 1], [], []>} : vector<16x32xbf16>, vector<32x16xbf16>, vector<16x16xf32> -> vector<16x16xf32>
    %c1_116 = arith.constant 1 : index
    %c0_117 = arith.constant 0 : index
    %c0_118 = arith.constant 0 : index
    %228 = vector.load %arg5[%c1_116, %c0_117, %c0_118] : memref<2x16x128xf32, #tpu.memory_space<vmem>>, vector<1x1x16xf32>
    %229 = vector.shape_cast %228 : vector<1x1x16xf32> to vector<16xf32>
    %230 = vector.shape_cast %229 : vector<16xf32> to vector<1x16xf32>
    %231 = vector.broadcast %230 : vector<1x16xf32> to vector<16x16xf32>
    %232 = arith.addf %227, %231 : vector<16x16xf32>
    %233 = vector.shape_cast %232 : vector<16x16xf32> to vector<2x8x16xf32>
    %c1_119 = arith.constant 1 : index
    %c2_120 = arith.constant 2 : index
    %c0_121 = arith.constant 0 : index
    %c0_122 = arith.constant 0 : index
    %234 = vector.load %arg2[%c1_119, %c2_120, %c0_121, %c0_122] : memref<2x6x32x16xbf16, #tpu.memory_space<vmem>>, vector<1x1x32x16xbf16>
    %235 = vector.shape_cast %234 : vector<1x1x32x16xbf16> to vector<32x16xbf16>
    %cst_123 = arith.constant dense<0.000000e+00> : vector<16x16xf32>
    %236 = tpu.matmul %224, %235, %cst_123 {dimension_numbers = #tpu.dot_dimension_numbers<[1], [0], [0], [1], [0, 0, 1, 1], [], []>} : vector<16x32xbf16>, vector<32x16xbf16>, vector<16x16xf32> -> vector<16x16xf32>
    %c1_124 = arith.constant 1 : index
    %c2_125 = arith.constant 2 : index
    %c0_126 = arith.constant 0 : index
    %237 = vector.load %arg5[%c1_124, %c2_125, %c0_126] : memref<2x16x128xf32, #tpu.memory_space<vmem>>, vector<1x1x16xf32>
    %238 = vector.shape_cast %237 : vector<1x1x16xf32> to vector<16xf32>
    %239 = vector.shape_cast %238 : vector<16xf32> to vector<1x16xf32>
    %240 = vector.broadcast %239 : vector<1x16xf32> to vector<16x16xf32>
    %241 = arith.addf %236, %240 : vector<16x16xf32>
    %242 = vector.shape_cast %241 : vector<16x16xf32> to vector<2x8x16xf32>
    %c1_127 = arith.constant 1 : index
    %c4_128 = arith.constant 4 : index
    %c0_129 = arith.constant 0 : index
    %c0_130 = arith.constant 0 : index
    %243 = vector.load %arg2[%c1_127, %c4_128, %c0_129, %c0_130] : memref<2x6x32x16xbf16, #tpu.memory_space<vmem>>, vector<1x1x32x16xbf16>
    %244 = vector.shape_cast %243 : vector<1x1x32x16xbf16> to vector<32x16xbf16>
    %cst_131 = arith.constant dense<0.000000e+00> : vector<16x16xf32>
    %245 = tpu.matmul %224, %244, %cst_131 {dimension_numbers = #tpu.dot_dimension_numbers<[1], [0], [0], [1], [0, 0, 1, 1], [], []>} : vector<16x32xbf16>, vector<32x16xbf16>, vector<16x16xf32> -> vector<16x16xf32>
    %c1_132 = arith.constant 1 : index
    %c4_133 = arith.constant 4 : index
    %c0_134 = arith.constant 0 : index
    %246 = vector.load %arg5[%c1_132, %c4_133, %c0_134] : memref<2x16x128xf32, #tpu.memory_space<vmem>>, vector<1x1x16xf32>
    %247 = vector.shape_cast %246 : vector<1x1x16xf32> to vector<16xf32>
    %248 = vector.shape_cast %247 : vector<16xf32> to vector<1x16xf32>
    %249 = vector.broadcast %248 : vector<1x16xf32> to vector<16x16xf32>
    %250 = arith.addf %245, %249 : vector<16x16xf32>
    %251 = vector.shape_cast %250 : vector<16x16xf32> to vector<2x8x16xf32>
    "tpu.trace_start"() <{level = 10 : i32, message = "bqd,bkd->bqk"}> : () -> ()
    %cst_135 = arith.constant dense<0.000000e+00> : vector<2x8x8xf32>
    %252 = tpu.matmul %233, %242, %cst_135 {dimension_numbers = #tpu.dot_dimension_numbers<[2], [2], [1], [1], [0, 0, 0, 1, 1, 1], [0], [0]>} : vector<2x8x16xf32>, vector<2x8x16xf32>, vector<2x8x8xf32> -> vector<2x8x8xf32>
    "tpu.trace_stop"() : () -> ()
    %253 = vector.broadcast %30 : vector<2x1x8xf32> to vector<2x8x8xf32>
    %254 = arith.addf %252, %253 : vector<2x8x8xf32>
    %cst_136 = arith.constant dense<0xFF800000> : vector<2x8xf32>
    %255 = vector.multi_reduction <maximumf>, %254, %cst_136 [2] : vector<2x8x8xf32> to vector<2x8xf32>
    %256 = vector.shape_cast %255 : vector<2x8xf32> to vector<2x8x1xf32>
    %257 = vector.broadcast %256 : vector<2x8x1xf32> to vector<2x8x8xf32>
    %258 = arith.subf %254, %257 : vector<2x8x8xf32>
    %259 = math.exp %258 : vector<2x8x8xf32>
    %cst_137 = arith.constant dense<0.000000e+00> : vector<2x8xf32>
    %260 = vector.multi_reduction <add>, %259, %cst_137 [2] : vector<2x8x8xf32> to vector<2x8xf32>
    %261 = vector.shape_cast %260 : vector<2x8xf32> to vector<2x8x1xf32>
    %262 = tpu.reciprocal %261 {approx = true} : vector<2x8x1xf32> -> vector<2x8x1xf32>
    %263 = vector.broadcast %262 : vector<2x8x1xf32> to vector<2x8x8xf32>
    %264 = arith.mulf %259, %263 : vector<2x8x8xf32>
    "tpu.trace_start"() <{level = 10 : i32, message = "bqk,bkd->bqd"}> : () -> ()
    %cst_138 = arith.constant dense<0.000000e+00> : vector<2x8x16xf32>
    %265 = tpu.matmul %264, %251, %cst_138 {dimension_numbers = #tpu.dot_dimension_numbers<[2], [1], [1], [2], [0, 0, 0, 1, 1, 2], [0], [0]>} : vector<2x8x8xf32>, vector<2x8x16xf32>, vector<2x8x16xf32> -> vector<2x8x16xf32>
    "tpu.trace_stop"() : () -> ()
    %266 = vector.shape_cast %265 : vector<2x8x16xf32> to vector<16x16xf32>
    %267 = arith.truncf %266 : vector<16x16xf32> to vector<16x16xbf16>
    %c1_139 = arith.constant 1 : index
    %c0_140 = arith.constant 0 : index
    %c0_141 = arith.constant 0 : index
    %c0_142 = arith.constant 0 : index
    %268 = vector.load %arg3[%c1_139, %c0_140, %c0_141, %c0_142] : memref<2x2x16x32xbf16, #tpu.memory_space<vmem>>, vector<1x1x16x32xbf16>
    %269 = vector.shape_cast %268 : vector<1x1x16x32xbf16> to vector<16x32xbf16>
    %cst_143 = arith.constant dense<0.000000e+00> : vector<16x32xf32>
    %270 = tpu.matmul %267, %269, %cst_143 {dimension_numbers = #tpu.dot_dimension_numbers<[1], [0], [0], [1], [0, 0, 1, 1], [], []>} : vector<16x16xbf16>, vector<16x32xbf16>, vector<16x32xf32> -> vector<16x32xf32>
    %c1_144 = arith.constant 1 : index
    %c1_145 = arith.constant 1 : index
    %c0_146 = arith.constant 0 : index
    %c0_147 = arith.constant 0 : index
    %271 = vector.load %arg2[%c1_144, %c1_145, %c0_146, %c0_147] : memref<2x6x32x16xbf16, #tpu.memory_space<vmem>>, vector<1x1x32x16xbf16>
    %272 = vector.shape_cast %271 : vector<1x1x32x16xbf16> to vector<32x16xbf16>
    %cst_148 = arith.constant dense<0.000000e+00> : vector<16x16xf32>
    %273 = tpu.matmul %224, %272, %cst_148 {dimension_numbers = #tpu.dot_dimension_numbers<[1], [0], [0], [1], [0, 0, 1, 1], [], []>} : vector<16x32xbf16>, vector<32x16xbf16>, vector<16x16xf32> -> vector<16x16xf32>
    %c1_149 = arith.constant 1 : index
    %c1_150 = arith.constant 1 : index
    %c0_151 = arith.constant 0 : index
    %274 = vector.load %arg5[%c1_149, %c1_150, %c0_151] : memref<2x16x128xf32, #tpu.memory_space<vmem>>, vector<1x1x16xf32>
    %275 = vector.shape_cast %274 : vector<1x1x16xf32> to vector<16xf32>
    %276 = vector.shape_cast %275 : vector<16xf32> to vector<1x16xf32>
    %277 = vector.broadcast %276 : vector<1x16xf32> to vector<16x16xf32>
    %278 = arith.addf %273, %277 : vector<16x16xf32>
    %279 = vector.shape_cast %278 : vector<16x16xf32> to vector<2x8x16xf32>
    %c1_152 = arith.constant 1 : index
    %c3_153 = arith.constant 3 : index
    %c0_154 = arith.constant 0 : index
    %c0_155 = arith.constant 0 : index
    %280 = vector.load %arg2[%c1_152, %c3_153, %c0_154, %c0_155] : memref<2x6x32x16xbf16, #tpu.memory_space<vmem>>, vector<1x1x32x16xbf16>
    %281 = vector.shape_cast %280 : vector<1x1x32x16xbf16> to vector<32x16xbf16>
    %cst_156 = arith.constant dense<0.000000e+00> : vector<16x16xf32>
    %282 = tpu.matmul %224, %281, %cst_156 {dimension_numbers = #tpu.dot_dimension_numbers<[1], [0], [0], [1], [0, 0, 1, 1], [], []>} : vector<16x32xbf16>, vector<32x16xbf16>, vector<16x16xf32> -> vector<16x16xf32>
    %c1_157 = arith.constant 1 : index
    %c3_158 = arith.constant 3 : index
    %c0_159 = arith.constant 0 : index
    %283 = vector.load %arg5[%c1_157, %c3_158, %c0_159] : memref<2x16x128xf32, #tpu.memory_space<vmem>>, vector<1x1x16xf32>
    %284 = vector.shape_cast %283 : vector<1x1x16xf32> to vector<16xf32>
    %285 = vector.shape_cast %284 : vector<16xf32> to vector<1x16xf32>
    %286 = vector.broadcast %285 : vector<1x16xf32> to vector<16x16xf32>
    %287 = arith.addf %282, %286 : vector<16x16xf32>
    %288 = vector.shape_cast %287 : vector<16x16xf32> to vector<2x8x16xf32>
    %c1_160 = arith.constant 1 : index
    %c5_161 = arith.constant 5 : index
    %c0_162 = arith.constant 0 : index
    %c0_163 = arith.constant 0 : index
    %289 = vector.load %arg2[%c1_160, %c5_161, %c0_162, %c0_163] : memref<2x6x32x16xbf16, #tpu.memory_space<vmem>>, vector<1x1x32x16xbf16>
    %290 = vector.shape_cast %289 : vector<1x1x32x16xbf16> to vector<32x16xbf16>
    %cst_164 = arith.constant dense<0.000000e+00> : vector<16x16xf32>
    %291 = tpu.matmul %224, %290, %cst_164 {dimension_numbers = #tpu.dot_dimension_numbers<[1], [0], [0], [1], [0, 0, 1, 1], [], []>} : vector<16x32xbf16>, vector<32x16xbf16>, vector<16x16xf32> -> vector<16x16xf32>
    %c1_165 = arith.constant 1 : index
    %c5_166 = arith.constant 5 : index
    %c0_167 = arith.constant 0 : index
    %292 = vector.load %arg5[%c1_165, %c5_166, %c0_167] : memref<2x16x128xf32, #tpu.memory_space<vmem>>, vector<1x1x16xf32>
    %293 = vector.shape_cast %292 : vector<1x1x16xf32> to vector<16xf32>
    %294 = vector.shape_cast %293 : vector<16xf32> to vector<1x16xf32>
    %295 = vector.broadcast %294 : vector<1x16xf32> to vector<16x16xf32>
    %296 = arith.addf %291, %295 : vector<16x16xf32>
    %297 = vector.shape_cast %296 : vector<16x16xf32> to vector<2x8x16xf32>
    "tpu.trace_start"() <{level = 10 : i32, message = "bqd,bkd->bqk"}> : () -> ()
    %cst_168 = arith.constant dense<0.000000e+00> : vector<2x8x8xf32>
    %298 = tpu.matmul %279, %288, %cst_168 {dimension_numbers = #tpu.dot_dimension_numbers<[2], [2], [1], [1], [0, 0, 0, 1, 1, 1], [0], [0]>} : vector<2x8x16xf32>, vector<2x8x16xf32>, vector<2x8x8xf32> -> vector<2x8x8xf32>
    "tpu.trace_stop"() : () -> ()
    %299 = vector.broadcast %30 : vector<2x1x8xf32> to vector<2x8x8xf32>
    %300 = arith.addf %298, %299 : vector<2x8x8xf32>
    %cst_169 = arith.constant dense<0xFF800000> : vector<2x8xf32>
    %301 = vector.multi_reduction <maximumf>, %300, %cst_169 [2] : vector<2x8x8xf32> to vector<2x8xf32>
    %302 = vector.shape_cast %301 : vector<2x8xf32> to vector<2x8x1xf32>
    %303 = vector.broadcast %302 : vector<2x8x1xf32> to vector<2x8x8xf32>
    %304 = arith.subf %300, %303 : vector<2x8x8xf32>
    %305 = math.exp %304 : vector<2x8x8xf32>
    %cst_170 = arith.constant dense<0.000000e+00> : vector<2x8xf32>
    %306 = vector.multi_reduction <add>, %305, %cst_170 [2] : vector<2x8x8xf32> to vector<2x8xf32>
    %307 = vector.shape_cast %306 : vector<2x8xf32> to vector<2x8x1xf32>
    %308 = tpu.reciprocal %307 {approx = true} : vector<2x8x1xf32> -> vector<2x8x1xf32>
    %309 = vector.broadcast %308 : vector<2x8x1xf32> to vector<2x8x8xf32>
    %310 = arith.mulf %305, %309 : vector<2x8x8xf32>
    "tpu.trace_start"() <{level = 10 : i32, message = "bqk,bkd->bqd"}> : () -> ()
    %cst_171 = arith.constant dense<0.000000e+00> : vector<2x8x16xf32>
    %311 = tpu.matmul %310, %297, %cst_171 {dimension_numbers = #tpu.dot_dimension_numbers<[2], [1], [1], [2], [0, 0, 0, 1, 1, 2], [0], [0]>} : vector<2x8x8xf32>, vector<2x8x16xf32>, vector<2x8x16xf32> -> vector<2x8x16xf32>
    "tpu.trace_stop"() : () -> ()
    %312 = vector.shape_cast %311 : vector<2x8x16xf32> to vector<16x16xf32>
    %313 = arith.truncf %312 : vector<16x16xf32> to vector<16x16xbf16>
    %c1_172 = arith.constant 1 : index
    %c1_173 = arith.constant 1 : index
    %c0_174 = arith.constant 0 : index
    %c0_175 = arith.constant 0 : index
    %314 = vector.load %arg3[%c1_172, %c1_173, %c0_174, %c0_175] : memref<2x2x16x32xbf16, #tpu.memory_space<vmem>>, vector<1x1x16x32xbf16>
    %315 = vector.shape_cast %314 : vector<1x1x16x32xbf16> to vector<16x32xbf16>
    %cst_176 = arith.constant dense<0.000000e+00> : vector<16x32xf32>
    %316 = tpu.matmul %313, %315, %cst_176 {dimension_numbers = #tpu.dot_dimension_numbers<[1], [0], [0], [1], [0, 0, 1, 1], [], []>} : vector<16x16xbf16>, vector<16x32xbf16>, vector<16x32xf32> -> vector<16x32xf32>
    %317 = arith.addf %270, %316 : vector<16x32xf32>
    %c1_177 = arith.constant 1 : index
    %c6_178 = arith.constant 6 : index
    %c0_179 = arith.constant 0 : index
    %318 = vector.load %arg5[%c1_177, %c6_178, %c0_179] : memref<2x16x128xf32, #tpu.memory_space<vmem>>, vector<1x1x32xf32>
    %319 = vector.shape_cast %318 : vector<1x1x32xf32> to vector<32xf32>
    %320 = vector.shape_cast %319 : vector<32xf32> to vector<1x32xf32>
    %321 = vector.broadcast %320 : vector<1x32xf32> to vector<16x32xf32>
    %322 = arith.addf %317, %321 : vector<16x32xf32>
    %323 = vector.shape_cast %322 : vector<16x32xf32> to vector<2x8x32xf32>
    %324 = arith.addf %222, %323 : vector<2x8x32xf32>
    %c1_180 = arith.constant 1 : index
    %c7_181 = arith.constant 7 : index
    %c0_182 = arith.constant 0 : index
    %325 = vector.load %arg5[%c1_180, %c7_181, %c0_182] : memref<2x16x128xf32, #tpu.memory_space<vmem>>, vector<1x1x32xf32>
    %326 = vector.shape_cast %325 : vector<1x1x32xf32> to vector<32xf32>
    %c1_183 = arith.constant 1 : index
    %c8_184 = arith.constant 8 : index
    %c0_185 = arith.constant 0 : index
    %327 = vector.load %arg5[%c1_183, %c8_184, %c0_185] : memref<2x16x128xf32, #tpu.memory_space<vmem>>, vector<1x1x32xf32>
    %328 = vector.shape_cast %327 : vector<1x1x32xf32> to vector<32xf32>
    %cst_186 = arith.constant dense<0.000000e+00> : vector<2x8xf32>
    %329 = vector.multi_reduction <add>, %324, %cst_186 [2] : vector<2x8x32xf32> to vector<2x8xf32>
    %330 = vector.shape_cast %329 : vector<2x8xf32> to vector<2x8x1xf32>
    %cst_187 = arith.constant 3.200000e+01 : f32
    %331 = vector.broadcast %cst_187 : f32 to vector<2x8x1xf32>
    %332 = arith.divf %330, %331 : vector<2x8x1xf32>
    %333 = vector.broadcast %332 : vector<2x8x1xf32> to vector<2x8x32xf32>
    %334 = arith.subf %324, %333 : vector<2x8x32xf32>
    %335 = arith.mulf %334, %334 : vector<2x8x32xf32>
    %cst_188 = arith.constant dense<0.000000e+00> : vector<2x8xf32>
    %336 = vector.multi_reduction <add>, %335, %cst_188 [2] : vector<2x8x32xf32> to vector<2x8xf32>
    %337 = vector.shape_cast %336 : vector<2x8xf32> to vector<2x8x1xf32>
    %cst_189 = arith.constant 3.200000e+01 : f32
    %338 = vector.broadcast %cst_189 : f32 to vector<2x8x1xf32>
    %339 = arith.divf %337, %338 : vector<2x8x1xf32>
    %340 = vector.broadcast %332 : vector<2x8x1xf32> to vector<2x8x32xf32>
    %341 = arith.subf %324, %340 : vector<2x8x32xf32>
    %cst_190 = arith.constant 9.99999996E-13 : f32
    %342 = vector.broadcast %cst_190 : f32 to vector<2x8x1xf32>
    %343 = arith.addf %339, %342 : vector<2x8x1xf32>
    %344 = math.rsqrt %343 : vector<2x8x1xf32>
    %345 = vector.broadcast %344 : vector<2x8x1xf32> to vector<2x8x32xf32>
    %346 = arith.mulf %341, %345 : vector<2x8x32xf32>
    %347 = vector.shape_cast %326 : vector<32xf32> to vector<1x1x32xf32>
    %348 = vector.broadcast %347 : vector<1x1x32xf32> to vector<2x8x32xf32>
    %349 = arith.mulf %346, %348 : vector<2x8x32xf32>
    %350 = vector.shape_cast %328 : vector<32xf32> to vector<1x1x32xf32>
    %351 = vector.broadcast %350 : vector<1x1x32xf32> to vector<2x8x32xf32>
    %352 = arith.addf %349, %351 : vector<2x8x32xf32>
    %353 = vector.shape_cast %352 : vector<2x8x32xf32> to vector<16x32xf32>
    %354 = arith.truncf %353 : vector<16x32xf32> to vector<16x32xbf16>
    %c1_191 = arith.constant 1 : index
    %c0_192 = arith.constant 0 : index
    %c0_193 = arith.constant 0 : index
    %c0_194 = arith.constant 0 : index
    %355 = vector.load %arg4[%c1_191, %c0_192, %c0_193, %c0_194] : memref<2x2x64x64xbf16, #tpu.memory_space<vmem>>, vector<1x1x32x64xbf16>
    %356 = vector.shape_cast %355 : vector<1x1x32x64xbf16> to vector<32x64xbf16>
    %cst_195 = arith.constant dense<0.000000e+00> : vector<16x64xf32>
    %357 = tpu.matmul %354, %356, %cst_195 {dimension_numbers = #tpu.dot_dimension_numbers<[1], [0], [0], [1], [0, 0, 1, 1], [], []>} : vector<16x32xbf16>, vector<32x64xbf16>, vector<16x64xf32> -> vector<16x64xf32>
    %c1_196 = arith.constant 1 : index
    %c9_197 = arith.constant 9 : index
    %c0_198 = arith.constant 0 : index
    %358 = vector.load %arg5[%c1_196, %c9_197, %c0_198] : memref<2x16x128xf32, #tpu.memory_space<vmem>>, vector<1x1x64xf32>
    %359 = vector.shape_cast %358 : vector<1x1x64xf32> to vector<64xf32>
    %360 = vector.shape_cast %359 : vector<64xf32> to vector<1x64xf32>
    %361 = vector.broadcast %360 : vector<1x64xf32> to vector<16x64xf32>
    %362 = arith.addf %357, %361 : vector<16x64xf32>
    %cst_199 = arith.constant 5.000000e-01 : f32
    %363 = vector.broadcast %cst_199 : f32 to vector<16x64xf32>
    %364 = arith.mulf %363, %362 : vector<16x64xf32>
    %cst_200 = arith.constant 4.471500e-02 : f32
    %365 = vector.broadcast %cst_200 : f32 to vector<16x64xf32>
    %366 = arith.mulf %365, %362 : vector<16x64xf32>
    %367 = arith.mulf %366, %362 : vector<16x64xf32>
    %368 = arith.mulf %367, %362 : vector<16x64xf32>
    %369 = arith.addf %362, %368 : vector<16x64xf32>
    %cst_201 = arith.constant 0.797884583 : f32
    %370 = vector.broadcast %cst_201 : f32 to vector<16x64xf32>
    %371 = arith.mulf %370, %369 : vector<16x64xf32>
    %372 = math.tanh %371 : vector<16x64xf32>
    %cst_202 = arith.constant 1.000000e+00 : f32
    %373 = vector.broadcast %cst_202 : f32 to vector<16x64xf32>
    %374 = arith.addf %373, %372 : vector<16x64xf32>
    %375 = arith.mulf %364, %374 : vector<16x64xf32>
    %376 = arith.truncf %375 : vector<16x64xf32> to vector<16x64xbf16>
    %c1_203 = arith.constant 1 : index
    %c1_204 = arith.constant 1 : index
    %c0_205 = arith.constant 0 : index
    %c0_206 = arith.constant 0 : index
    %377 = vector.load %arg4[%c1_203, %c1_204, %c0_205, %c0_206] : memref<2x2x64x64xbf16, #tpu.memory_space<vmem>>, vector<1x1x64x32xbf16>
    %378 = vector.shape_cast %377 : vector<1x1x64x32xbf16> to vector<64x32xbf16>
    %cst_207 = arith.constant dense<0.000000e+00> : vector<16x32xf32>
    %379 = tpu.matmul %376, %378, %cst_207 {dimension_numbers = #tpu.dot_dimension_numbers<[1], [0], [0], [1], [0, 0, 1, 1], [], []>} : vector<16x64xbf16>, vector<64x32xbf16>, vector<16x32xf32> -> vector<16x32xf32>
    %c1_208 = arith.constant 1 : index
    %c10_209 = arith.constant 10 : index
    %c0_210 = arith.constant 0 : index
    %380 = vector.load %arg5[%c1_208, %c10_209, %c0_210] : memref<2x16x128xf32, #tpu.memory_space<vmem>>, vector<1x1x32xf32>
    %381 = vector.shape_cast %380 : vector<1x1x32xf32> to vector<32xf32>
    %382 = vector.shape_cast %381 : vector<32xf32> to vector<1x32xf32>
    %383 = vector.broadcast %382 : vector<1x32xf32> to vector<16x32xf32>
    %384 = arith.addf %379, %383 : vector<16x32xf32>
    %385 = vector.shape_cast %384 : vector<16x32xf32> to vector<2x8x32xf32>
    %386 = arith.addf %352, %385 : vector<2x8x32xf32>
    %c1_211 = arith.constant 1 : index
    %c11_212 = arith.constant 11 : index
    %c0_213 = arith.constant 0 : index
    %387 = vector.load %arg5[%c1_211, %c11_212, %c0_213] : memref<2x16x128xf32, #tpu.memory_space<vmem>>, vector<1x1x32xf32>
    %388 = vector.shape_cast %387 : vector<1x1x32xf32> to vector<32xf32>
    %c1_214 = arith.constant 1 : index
    %c12_215 = arith.constant 12 : index
    %c0_216 = arith.constant 0 : index
    %389 = vector.load %arg5[%c1_214, %c12_215, %c0_216] : memref<2x16x128xf32, #tpu.memory_space<vmem>>, vector<1x1x32xf32>
    %390 = vector.shape_cast %389 : vector<1x1x32xf32> to vector<32xf32>
    %cst_217 = arith.constant dense<0.000000e+00> : vector<2x8xf32>
    %391 = vector.multi_reduction <add>, %386, %cst_217 [2] : vector<2x8x32xf32> to vector<2x8xf32>
    %392 = vector.shape_cast %391 : vector<2x8xf32> to vector<2x8x1xf32>
    %cst_218 = arith.constant 3.200000e+01 : f32
    %393 = vector.broadcast %cst_218 : f32 to vector<2x8x1xf32>
    %394 = arith.divf %392, %393 : vector<2x8x1xf32>
    %395 = vector.broadcast %394 : vector<2x8x1xf32> to vector<2x8x32xf32>
    %396 = arith.subf %386, %395 : vector<2x8x32xf32>
    %397 = arith.mulf %396, %396 : vector<2x8x32xf32>
    %cst_219 = arith.constant dense<0.000000e+00> : vector<2x8xf32>
    %398 = vector.multi_reduction <add>, %397, %cst_219 [2] : vector<2x8x32xf32> to vector<2x8xf32>
    %399 = vector.shape_cast %398 : vector<2x8xf32> to vector<2x8x1xf32>
    %cst_220 = arith.constant 3.200000e+01 : f32
    %400 = vector.broadcast %cst_220 : f32 to vector<2x8x1xf32>
    %401 = arith.divf %399, %400 : vector<2x8x1xf32>
    %402 = vector.broadcast %394 : vector<2x8x1xf32> to vector<2x8x32xf32>
    %403 = arith.subf %386, %402 : vector<2x8x32xf32>
    %cst_221 = arith.constant 9.99999996E-13 : f32
    %404 = vector.broadcast %cst_221 : f32 to vector<2x8x1xf32>
    %405 = arith.addf %401, %404 : vector<2x8x1xf32>
    %406 = math.rsqrt %405 : vector<2x8x1xf32>
    %407 = vector.broadcast %406 : vector<2x8x1xf32> to vector<2x8x32xf32>
    %408 = arith.mulf %403, %407 : vector<2x8x32xf32>
    %409 = vector.shape_cast %388 : vector<32xf32> to vector<1x1x32xf32>
    %410 = vector.broadcast %409 : vector<1x1x32xf32> to vector<2x8x32xf32>
    %411 = arith.mulf %408, %410 : vector<2x8x32xf32>
    %412 = vector.shape_cast %390 : vector<32xf32> to vector<1x1x32xf32>
    %413 = vector.broadcast %412 : vector<1x1x32xf32> to vector<2x8x32xf32>
    %414 = arith.addf %411, %413 : vector<2x8x32xf32>
    %415 = vector.extract_strided_slice %414 {offsets = [0, 0, 0], sizes = [2, 1, 32], strides = [1, 1, 1]} : vector<2x8x32xf32> to vector<2x1x32xf32>
    %416 = vector.shape_cast %415 : vector<2x1x32xf32> to vector<2x32xf32>
    %417 = arith.truncf %416 : vector<2x32xf32> to vector<2x32xbf16>
    %c0_222 = arith.constant 0 : index
    %c0_223 = arith.constant 0 : index
    %c0_224 = arith.constant 0 : index
    %418 = vector.load %arg6[%c0_222, %c0_223, %c0_224] : memref<2x32x128xbf16, #tpu.memory_space<vmem>>, vector<1x32x32xbf16>
    %419 = vector.shape_cast %418 : vector<1x32x32xbf16> to vector<32x32xbf16>
    %cst_225 = arith.constant dense<0.000000e+00> : vector<2x32xf32>
    %420 = tpu.matmul %417, %419, %cst_225 {dimension_numbers = #tpu.dot_dimension_numbers<[1], [0], [0], [1], [0, 0, 1, 1], [], []>} : vector<2x32xbf16>, vector<32x32xbf16>, vector<2x32xf32> -> vector<2x32xf32>
    %c2_226 = arith.constant 2 : index
    %c0_227 = arith.constant 0 : index
    %421 = vector.load %arg7[%c2_226, %c0_227] : memref<8x128xf32, #tpu.memory_space<vmem>>, vector<1x32xf32>
    %422 = vector.shape_cast %421 : vector<1x32xf32> to vector<32xf32>
    %423 = vector.shape_cast %422 : vector<32xf32> to vector<1x32xf32>
    %424 = vector.broadcast %423 : vector<1x32xf32> to vector<2x32xf32>
    %425 = arith.addf %420, %424 : vector<2x32xf32>
    %426 = math.tanh %425 : vector<2x32xf32>
    %427 = arith.truncf %426 : vector<2x32xf32> to vector<2x32xbf16>
    %c1_228 = arith.constant 1 : index
    %c0_229 = arith.constant 0 : index
    %c0_230 = arith.constant 0 : index
    %428 = vector.load %arg6[%c1_228, %c0_229, %c0_230] : memref<2x32x128xbf16, #tpu.memory_space<vmem>>, vector<1x32x128xbf16>
    %429 = vector.shape_cast %428 : vector<1x32x128xbf16> to vector<32x128xbf16>
    %cst_231 = arith.constant dense<0.000000e+00> : vector<2x128xf32>
    %430 = tpu.matmul %427, %429, %cst_231 {dimension_numbers = #tpu.dot_dimension_numbers<[1], [0], [0], [1], [0, 0, 1, 1], [], []>} : vector<2x32xbf16>, vector<32x128xbf16>, vector<2x128xf32> -> vector<2x128xf32>
    %c3_232 = arith.constant 3 : index
    %c0_233 = arith.constant 0 : index
    %431 = vector.load %arg7[%c3_232, %c0_233] : memref<8x128xf32, #tpu.memory_space<vmem>>, vector<1x128xf32>
    %432 = vector.shape_cast %431 : vector<1x128xf32> to vector<128xf32>
    %433 = vector.shape_cast %432 : vector<128xf32> to vector<1x128xf32>
    %434 = vector.broadcast %433 : vector<1x128xf32> to vector<2x128xf32>
    %435 = arith.addf %430, %434 : vector<2x128xf32>
    %c0_234 = arith.constant 0 : index
    %c0_235 = arith.constant 0 : index
    %436 = vector.load %arg8[%c0_234, %c0_235] : memref<2x128xf32, #tpu.memory_space<vmem>>, vector<2x128xf32>
    tpu.vector_store %arg8[%c0_234, %c0_235], %435 {strides = array<i32>} : memref<2x128xf32, #tpu.memory_space<vmem>>, vector<2x128xf32>,
    return
  }
}

</mosaic_0001>

<llo_original>
// kernel: tpu_custom_call.1
$region0: #{tpu_custom_call.1}
  #allocation0 [shape = 'u32[]', space=smem, size = 0x4, offset = 0x4, fixed_abs, tag = 'smem constant byte address 0x4 - core index']
  #allocation1 [shape = 'u32[72,128]{1,0:T(1,128)}', space=vmem, size = 0x9000, scoped, tag = 'internal scratch']
  %s0 = inlined_call_operand.vmem [shape: f32[2,8,32], index: 0, kind: input, shape index: {}]
  %s1 = inlined_call_operand.vmem [shape: f32[2,8], index: 1, kind: input, shape index: {}]
  %s2 = inlined_call_operand.vmem [shape: bf16[2,6,32,16], index: 2, kind: input, shape index: {}]
  %s3 = inlined_call_operand.vmem [shape: bf16[2,2,16,32], index: 3, kind: input, shape index: {}]
  %s4 = inlined_call_operand.vmem [shape: bf16[2,2,64,64], index: 4, kind: input, shape index: {}]
  %s5 = inlined_call_operand.vmem [shape: f32[2,16,128], index: 5, kind: input, shape index: {}]
  %s6 = inlined_call_operand.vmem [shape: bf16[2,32,128], index: 6, kind: input, shape index: {}]
  %s7 = inlined_call_operand.vmem [shape: f32[8,128], index: 7, kind: input, shape index: {}]
  %s8 = inlined_call_operand.hbm [shape: f32[2,128], index: 8, kind: output, shape index: {}]
  %s9 = sld [smem:[#allocation0]]
  $region42: #{tpu_custom_call.1} parent=0
    _
  %s11 = ssub.s32 1, %s9
  %s12 = scalar_select 0, %s11, %s9
  $region1: #{tpu_custom_call.1} parent=0
    #allocation2 [shape = 'u8[1024]{0}', space=vmem, size = 0x400, scoped, tag = 'output window, operand 0, single buffered']
    #allocation3 [shape = 's32[1]{0}', space=sflag, size = 0x4, scoped, tag = 'scoped memory for tpu_custom_call.1']
    %13 = vsyncpa [#allocation3], 0
    // Predicated region
    $region2: #{tpu_custom_call.1} parent=1 // pred_check
      _
    $region3: #{tpu_custom_call.1} parent=1 // pred_check_branch
      %15 = sbr.rel (0) target = $region5
    $region4: #{tpu_custom_call.1} parent=1 // pred_region
      _
    $region5: #{tpu_custom_call.1} parent=1 // pred_fallthru
      _
    // Predicated region
    $region6: #{tpu_custom_call.1} parent=1 // pred_check
      _
    $region7: #{tpu_custom_call.1} parent=1 // pred_check_branch
      %17 = sbr.rel (0) target = $region9
    $region8: #{tpu_custom_call.1} parent=1 // pred_region
      _
    $region9: #{tpu_custom_call.1} parent=1 // pred_fallthru
      _
    // Predicated region
    $region10: #{tpu_custom_call.1} parent=1 // pred_check
      _
    $region11: #{tpu_custom_call.1} parent=1 // pred_check_branch
      %19 = sbr.rel (0) target = $region13
    $region12: #{tpu_custom_call.1} parent=1 // pred_region
      _
    $region13: #{tpu_custom_call.1} parent=1 // pred_fallthru
      _
    // Predicated region
    $region14: #{tpu_custom_call.1} parent=1 // pred_check
      _
    $region15: #{tpu_custom_call.1} parent=1 // pred_check_branch
      %21 = sbr.rel (0) target = $region17
    $region16: #{tpu_custom_call.1} parent=1 // pred_region
      _
    $region17: #{tpu_custom_call.1} parent=1 // pred_fallthru
      _
    // Predicated region
    $region18: #{tpu_custom_call.1} parent=1 // pred_check
      _
    $region19: #{tpu_custom_call.1} parent=1 // pred_check_branch
      %23 = sbr.rel (0) target = $region21
    $region20: #{tpu_custom_call.1} parent=1 // pred_region
      _
    $region21: #{tpu_custom_call.1} parent=1 // pred_fallthru
      _
    // Predicated region
    $region22: #{tpu_custom_call.1} parent=1 // pred_check
      _
    $region23: #{tpu_custom_call.1} parent=1 // pred_check_branch
      %25 = sbr.rel (0) target = $region25
    $region24: #{tpu_custom_call.1} parent=1 // pred_region
      _
    $region25: #{tpu_custom_call.1} parent=1 // pred_fallthru
      _
    // Predicated region
    $region26: #{tpu_custom_call.1} parent=1 // pred_check
      _
    $region27: #{tpu_custom_call.1} parent=1 // pred_check_branch
      %27 = sbr.rel (0) target = $region29
    $region28: #{tpu_custom_call.1} parent=1 // pred_region
      _
    $region29: #{tpu_custom_call.1} parent=1 // pred_fallthru
      _
    // Predicated region
    $region30: #{tpu_custom_call.1} parent=1 // pred_check
      _
    $region31: #{tpu_custom_call.1} parent=1 // pred_check_branch
      %29 = sbr.rel (0) target = $region33
    $region32: #{tpu_custom_call.1} parent=1 // pred_region
      _
    $region33: #{tpu_custom_call.1} parent=1 // pred_fallthru
      _
    %v31 = vld [vmem:[%s0] sm:$0xff]
    %v32 = vld [vmem:[%s0 + $0x8] sm:$0xff]
    %v33 = vld [vmem:[%s7] sm:$0x1]
    %v34 = vld [vmem:[%s7 + $0x1] sm:$0x1]
    %vm35 = vcmask 261120
    %v36 = vsel %vm35, %v31, 0.0
    %37 = vadd.xlane.f32.xlu0 %v36
    %v38 = vpop.xlane.xlu0 %37
    %v39 = vsel %vm35, %v32, 0.0
    %40 = vadd.xlane.f32.xlu0 %v39
    %v41 = vpop.xlane.xlu0 %40
    %v42 = vrcp.pop 32.0
    %v43 = vmul.f32 32.0, %v42
    %v44 = vsub.f32 1.0, %v43
    %v45 = vmul.f32 %v42, %v44
    %v46 = vadd.f32 %v42, %v45
    %vm47 = vweird.f32 %v42
    %v48 = vsel %vm47, %v42, %v46
    %v49 = vmul.f32 %v38, %v48
    %v50 = vmul.f32 %v41, %v48
    %v51 = vsub.f32 %v31, %v49
    %v52 = vsub.f32 %v32, %v50
    %v53 = vmul.f32 %v51, %v51
    %v54 = vmul.f32 %v52, %v52
    %v55 = vsel %vm35, %v53, 0.0
    %56 = vadd.xlane.f32.xlu0 %v55
    %v57 = vpop.xlane.xlu0 %56
    %v58 = vsel %vm35, %v54, 0.0
    %59 = vadd.xlane.f32.xlu0 %v58
    %v60 = vpop.xlane.xlu0 %59
    %v61 = vmul.f32 %v57, %v48
    %v62 = vmul.f32 %v60, %v48
    %v63 = vadd.f32 %v61, 1e-12
    %v64 = vadd.f32 %v62, 1e-12
    %v65 = vrsqrt.pop %v63
    %v66 = vmul.f32 %v65, %v63
    %v67 = vmul.f32 %v66, %v65
    %v68 = vmul.f32 0.5, %v67
    %v69 = vsub.f32 1.5, %v68
    %v70 = vmul.f32 %v65, %v69
    %vm71 = vweird.f32 %v63
    %vm72 = vweird.f32 %v65
    %vm73 = vmor %vm71, %vm72
    %v74 = vsel %vm73, %v65, %v70
    %v75 = vrsqrt.pop %v64
    %v76 = vmul.f32 %v75, %v64
    %v77 = vmul.f32 %v76, %v75
    %v78 = vmul.f32 0.5, %v77
    %v79 = vsub.f32 1.5, %v78
    %v80 = vmul.f32 %v75, %v79
    %vm81 = vweird.f32 %v64
    %vm82 = vweird.f32 %v75
    %vm83 = vmor %vm81, %vm82
    %v84 = vsel %vm83, %v75, %v80
    %v85 = vmul.f32 %v51, %v74
    %v86 = vmul.f32 %v52, %v84
    %v87 = vperm.slane %v33, 0
    %v88 = vmul.f32 %v85, %v87
    %v89 = vmul.f32 %v86, %v87
    %v90 = vperm.slane %v34, 0
    %v91 = vadd.f32 %v88, %v90
    %v92 = vadd.f32 %v89, %v90
    %v93 = vld [vmem:[%s1] sm:$0x3]
    %v95 = vrot.slane %v93, 1
    %v96 = vpack.c.bf16 %v92, %v91
    %v97 = vld [vmem:[%s2] sm:$0xf]
    %v98 = vld [vmem:[%s2 + $0x4] sm:$0xf]
    %v99 = vld [vmem:[%s2 + $0x8] sm:$0xf]
    %v100 = vld [vmem:[%s2 + $0xc] sm:$0xf]
    %v101 = vld [vmem:[%s5] sm:$0x1]
    %v102 = vperm.slane %v101, 0
    %v107 = vunpack.c.l.b16 %v97
    %v108 = vunpack.c.l.b16 %v98
    %v109 = vunpack.c.l.b16 %v99
    %v110 = vunpack.c.l.b16 %v100
    %v111 = vpack.c.b16 %v108, %v107
    %v112 = vpack.c.b16 %v110, %v109
    %v116 = vsel %vm35, %v96, 0
    %118 = vmatpush.bf16.msra.mxu0 0
    %119 = vmatpush.bf16.msra.mxu0 0
    %120 = vmatpush.bf16.msra.mxu0 0
    %121 = vmatpush.bf16.msra.mxu0 0
    %122 = vmatpush.bf16.msra.mxu0 0
    %123 = vmatpush.bf16.msra.mxu0 0
    %124 = vmatpush.bf16.msra.mxu0 %v112
    %125 = vmatpush.bf16.msra.mxu0 %v111
    %126 = vmatmul.bf16.gmra.mxu0 %v116
    %v127 = vpop.f32.mrf.mxu0
    %v128 = vadd.f32 %v102, %v127
    %v129 = vpop.f32.mrf.mxu0
    %v130 = vadd.f32 %v102, %v129
    %131 = vdwg.mxu0
    %s132 = scalar_lea.vmem %s2, 32
    %v133 = vld [vmem:[%s132] sm:$0xf]
    %v134 = vld [vmem:[%s132 + $0x4] sm:$0xf]
    %v135 = vld [vmem:[%s132 + $0x8] sm:$0xf]
    %v136 = vld [vmem:[%s132 + $0xc] sm:$0xf]
    %v137 = vld [vmem:[%s5 + $0x2] sm:$0x1]
    %v138 = vperm.slane %v137, 0
    %v143 = vunpack.c.l.b16 %v133
    %v144 = vunpack.c.l.b16 %v134
    %v145 = vunpack.c.l.b16 %v135
    %v146 = vunpack.c.l.b16 %v136
    %v147 = vpack.c.b16 %v144, %v143
    %v148 = vpack.c.b16 %v146, %v145
    %151 = vmatpush.bf16.msra.mxu0 0
    %152 = vmatpush.bf16.msra.mxu0 0
    %153 = vmatpush.bf16.msra.mxu0 0
    %154 = vmatpush.bf16.msra.mxu0 0
    %155 = vmatpush.bf16.msra.mxu0 0
    %156 = vmatpush.bf16.msra.mxu0 0
    %157 = vmatpush.bf16.msra.mxu0 %v148
    %158 = vmatpush.bf16.msra.mxu0 %v147
    %159 = vmatmul.bf16.gmra.mxu0 %v116
    %v160 = vpop.f32.mrf.mxu0
    %v161 = vadd.f32 %v138, %v160
    %v162 = vpop.f32.mrf.mxu0
    %v163 = vadd.f32 %v138, %v162
    %164 = vdwg.mxu0
    %s165 = scalar_lea.vmem %s2, 64
    %v166 = vld [vmem:[%s165] sm:$0xf]
    %v167 = vld [vmem:[%s165 + $0x4] sm:$0xf]
    %v168 = vld [vmem:[%s165 + $0x8] sm:$0xf]
    %v169 = vld [vmem:[%s165 + $0xc] sm:$0xf]
    %v170 = vld [vmem:[%s5 + $0x4] sm:$0x1]
    %v171 = vperm.slane %v170, 0
    %v176 = vunpack.c.l.b16 %v166
    %v177 = vunpack.c.l.b16 %v167
    %v178 = vunpack.c.l.b16 %v168
    %v179 = vunpack.c.l.b16 %v169
    %v180 = vpack.c.b16 %v177, %v176
    %v181 = vpack.c.b16 %v179, %v178
    %184 = vmatpush.bf16.msra.mxu0 0
    %185 = vmatpush.bf16.msra.mxu0 0
    %186 = vmatpush.bf16.msra.mxu0 0
    %187 = vmatpush.bf16.msra.mxu0 0
    %188 = vmatpush.bf16.msra.mxu0 0
    %189 = vmatpush.bf16.msra.mxu0 0
    %190 = vmatpush.bf16.msra.mxu0 %v181
    %191 = vmatpush.bf16.msra.mxu0 %v180
    %192 = vmatmul.bf16.gmra.mxu0 %v116
    %v193 = vpop.f32.mrf.mxu0
    %v194 = vadd.f32 %v171, %v193
    %v195 = vpop.f32.mrf.mxu0
    %v196 = vadd.f32 %v171, %v195
    %197 = vdwg.mxu0
    %v198 = vperm.slane %v93, 0
    %v199 = vperm.slane %v95, 0
    %vm202 = vcmask 130048
    %v204 = vsel %vm202, %v128, 0
    %v207 = vsel %vm202, %v161, 0
    %209 = vmatpush.xpose.msra.mxu0 0.0
    %210 = vmatpush.xpose.msra.mxu0 0.0
    %211 = vmatpush.xpose.msra.mxu0 0.0
    %212 = vmatpush.xpose.msra.mxu0 0.0
    %213 = vmatpush.xpose.msra.mxu0 0.0
    %214 = vmatpush.xpose.msra.mxu0 0.0
    %215 = vmatpush.xpose.msra.mxu0 0.0
    %216 = vmatpush.xpose.msra.mxu0 0.0
    %217 = vmatpush.xpose.msra.mxu0 0.0
    %218 = vmatpush.xpose.msra.mxu0 0.0
    %219 = vmatpush.xpose.msra.mxu0 0.0
    %220 = vmatpush.xpose.msra.mxu0 0.0
    %221 = vmatpush.xpose.msra.mxu0 0.0
    %222 = vmatpush.xpose.msra.mxu0 0.0
    %223 = vmatpush.xpose.msra.mxu0 0.0
    %224 = vmatpush.xpose.msra.mxu0 %v207
    %225 = vmatmul.f32.gmra.mxu0 %v204
    %v226 = vpop.f32.mrf.mxu0
    %v227 = vadd.f32 %v198, %v226
    %228 = vdwg.mxu0
    %v230 = vsel %vm202, %v130, 0
    %v233 = vsel %vm202, %v163, 0
    %235 = vmatpush.xpose.msra.mxu0 0.0
    %236 = vmatpush.xpose.msra.mxu0 0.0
    %237 = vmatpush.xpose.msra.mxu0 0.0
    %238 = vmatpush.xpose.msra.mxu0 0.0
    %239 = vmatpush.xpose.msra.mxu0 0.0
    %240 = vmatpush.xpose.msra.mxu0 0.0
    %241 = vmatpush.xpose.msra.mxu0 0.0
    %242 = vmatpush.xpose.msra.mxu0 0.0
    %243 = vmatpush.xpose.msra.mxu0 0.0
    %244 = vmatpush.xpose.msra.mxu0 0.0
    %245 = vmatpush.xpose.msra.mxu0 0.0
    %246 = vmatpush.xpose.msra.mxu0 0.0
    %247 = vmatpush.xpose.msra.mxu0 0.0
    %248 = vmatpush.xpose.msra.mxu0 0.0
    %249 = vmatpush.xpose.msra.mxu0 0.0
    %250 = vmatpush.xpose.msra.mxu0 %v233
    %251 = vmatmul.f32.gmra.mxu0 %v230
    %v252 = vpop.f32.mrf.mxu0
    %v253 = vadd.f32 %v199, %v252
    %254 = vdwg.mxu0
    %vm255 = vcmask 64512
    %v256 = vsel %vm255, %v227, -inf
    %257 = vmax.xlane.f32.xlu0 %v256
    %v258 = vpop.xlane.xlu0 %257
    %v259 = vsel %vm255, %v253, -inf
    %260 = vmax.xlane.f32.xlu0 %v259
    %v261 = vpop.xlane.xlu0 %260
    %v262 = vsub.f32 %v227, %v258
    %v263 = vsub.f32 %v253, %v261
    %v264 = vmul.f32 %v262, 1.442695
    %v265 = vpow.pop %v264
    %v266 = vmul.f32 %v263, 1.442695
    %v267 = vpow.pop %v266
    %v268 = vsel %vm255, %v265, 0.0
    %269 = vadd.xlane.f32.xlu0 %v268
    %v270 = vpop.xlane.xlu0 %269
    %v271 = vsel %vm255, %v267, 0.0
    %272 = vadd.xlane.f32.xlu0 %v271
    %v273 = vpop.xlane.xlu0 %272
    %v274 = vrcp.pop %v270
    %v275 = vrcp.pop %v273
    %v276 = vmul.f32 %v265, %v274
    %v277 = vmul.f32 %v267, %v275
    %v279 = vsel %vm255, %v276, 0
    %281 = vmatpush.msra.mxu0 0.0
    %282 = vmatpush.msra.mxu0 0.0
    %283 = vmatpush.msra.mxu0 0.0
    %284 = vmatpush.msra.mxu0 0.0
    %285 = vmatpush.msra.mxu0 0.0
    %286 = vmatpush.msra.mxu0 0.0
    %287 = vmatpush.msra.mxu0 0.0
    %288 = vmatpush.msra.mxu0 0.0
    %289 = vmatpush.msra.mxu0 0.0
    %290 = vmatpush.msra.mxu0 0.0
    %291 = vmatpush.msra.mxu0 0.0
    %292 = vmatpush.msra.mxu0 0.0
    %293 = vmatpush.msra.mxu0 0.0
    %294 = vmatpush.msra.mxu0 0.0
    %295 = vmatpush.msra.mxu0 0.0
    %296 = vmatpush.msra.mxu0 %v194
    %297 = vmatmul.f32.gmra.mxu0 %v279
    %v298 = vpop.f32.mrf.mxu0
    %v299 = vadd.f32 0.0, %v298
    %300 = vdwg.mxu0
    %v302 = vsel %vm255, %v277, 0
    %304 = vmatpush.msra.mxu0 0.0
    %305 = vmatpush.msra.mxu0 0.0
    %306 = vmatpush.msra.mxu0 0.0
    %307 = vmatpush.msra.mxu0 0.0
    %308 = vmatpush.msra.mxu0 0.0
    %309 = vmatpush.msra.mxu0 0.0
    %310 = vmatpush.msra.mxu0 0.0
    %311 = vmatpush.msra.mxu0 0.0
    %312 = vmatpush.msra.mxu0 0.0
    %313 = vmatpush.msra.mxu0 0.0
    %314 = vmatpush.msra.mxu0 0.0
    %315 = vmatpush.msra.mxu0 0.0
    %316 = vmatpush.msra.mxu0 0.0
    %317 = vmatpush.msra.mxu0 0.0
    %318 = vmatpush.msra.mxu0 0.0
    %319 = vmatpush.msra.mxu0 %v196
    %320 = vmatmul.f32.gmra.mxu0 %v302
    %v321 = vpop.f32.mrf.mxu0
    %v322 = vadd.f32 0.0, %v321
    %323 = vdwg.mxu0
    %v324 = vpack.c.bf16 %v322, %v299
    %v325 = vld [vmem:[%s3] sm:$0xf]
    %v326 = vld [vmem:[%s3 + $0x4] sm:$0xf]
    %s327 = scalar_lea.vmem %s2, 16
    %v328 = vld [vmem:[%s327] sm:$0xf]
    %v329 = vld [vmem:[%s327 + $0x4] sm:$0xf]
    %v330 = vld [vmem:[%s327 + $0x8] sm:$0xf]
    %v331 = vld [vmem:[%s327 + $0xc] sm:$0xf]
    %v332 = vld [vmem:[%s5 + $0x1] sm:$0x1]
    %v333 = vperm.slane %v332, 0
    %v338 = vunpack.c.l.b16 %v328
    %v339 = vunpack.c.l.b16 %v329
    %v340 = vunpack.c.l.b16 %v330
    %v341 = vunpack.c.l.b16 %v331
    %v342 = vpack.c.b16 %v339, %v338
    %v343 = vpack.c.b16 %v341, %v340
    %346 = vmatpush.bf16.msra.mxu0 0
    %347 = vmatpush.bf16.msra.mxu0 0
    %348 = vmatpush.bf16.msra.mxu0 0
    %349 = vmatpush.bf16.msra.mxu0 0
    %350 = vmatpush.bf16.msra.mxu0 0
    %351 = vmatpush.bf16.msra.mxu0 0
    %352 = vmatpush.bf16.msra.mxu0 %v343
    %353 = vmatpush.bf16.msra.mxu0 %v342
    %354 = vmatmul.bf16.gmra.mxu0 %v116
    %v355 = vpop.f32.mrf.mxu0
    %v356 = vadd.f32 %v333, %v355
    %v357 = vpop.f32.mrf.mxu0
    %v358 = vadd.f32 %v333, %v357
    %359 = vdwg.mxu0
    %s360 = scalar_lea.vmem %s2, 48
    %v361 = vld [vmem:[%s360] sm:$0xf]
    %v362 = vld [vmem:[%s360 + $0x4] sm:$0xf]
    %v363 = vld [vmem:[%s360 + $0x8] sm:$0xf]
    %v364 = vld [vmem:[%s360 + $0xc] sm:$0xf]
    %v365 = vld [vmem:[%s5 + $0x3] sm:$0x1]
    %v366 = vperm.slane %v365, 0
    %v371 = vunpack.c.l.b16 %v361
    %v372 = vunpack.c.l.b16 %v362
    %v373 = vunpack.c.l.b16 %v363
    %v374 = vunpack.c.l.b16 %v364
    %v375 = vpack.c.b16 %v372, %v371
    %v376 = vpack.c.b16 %v374, %v373
    %379 = vmatpush.bf16.msra.mxu0 0
    %380 = vmatpush.bf16.msra.mxu0 0
    %381 = vmatpush.bf16.msra.mxu0 0
    %382 = vmatpush.bf16.msra.mxu0 0
    %383 = vmatpush.bf16.msra.mxu0 0
    %384 = vmatpush.bf16.msra.mxu0 0
    %385 = vmatpush.bf16.msra.mxu0 %v376
    %386 = vmatpush.bf16.msra.mxu0 %v375
    %387 = vmatmul.bf16.gmra.mxu0 %v116
    %v388 = vpop.f32.mrf.mxu0
    %v389 = vadd.f32 %v366, %v388
    %v390 = vpop.f32.mrf.mxu0
    %v391 = vadd.f32 %v366, %v390
    %392 = vdwg.mxu0
    %s393 = scalar_lea.vmem %s2, 80
    %v394 = vld [vmem:[%s393] sm:$0xf]
    %v395 = vld [vmem:[%s393 + $0x4] sm:$0xf]
    %v396 = vld [vmem:[%s393 + $0x8] sm:$0xf]
    %v397 = vld [vmem:[%s393 + $0xc] sm:$0xf]
    %v398 = vld [vmem:[%s5 + $0x5] sm:$0x1]
    %v399 = vperm.slane %v398, 0
    %v404 = vunpack.c.l.b16 %v394
    %v405 = vunpack.c.l.b16 %v395
    %v406 = vunpack.c.l.b16 %v396
    %v407 = vunpack.c.l.b16 %v397
    %v408 = vpack.c.b16 %v405, %v404
    %v409 = vpack.c.b16 %v407, %v406
    %412 = vmatpush.bf16.msra.mxu0 0
    %413 = vmatpush.bf16.msra.mxu0 0
    %414 = vmatpush.bf16.msra.mxu0 0
    %415 = vmatpush.bf16.msra.mxu0 0
    %416 = vmatpush.bf16.msra.mxu0 0
    %417 = vmatpush.bf16.msra.mxu0 0
    %418 = vmatpush.bf16.msra.mxu0 %v409
    %419 = vmatpush.bf16.msra.mxu0 %v408
    %420 = vmatmul.bf16.gmra.mxu0 %v116
    %v421 = vpop.f32.mrf.mxu0
    %v422 = vadd.f32 %v399, %v421
    %v423 = vpop.f32.mrf.mxu0
    %v424 = vadd.f32 %v399, %v423
    %425 = vdwg.mxu0
    %v427 = vsel %vm202, %v356, 0
    %v430 = vsel %vm202, %v389, 0
    %432 = vmatpush.xpose.msra.mxu0 0.0
    %433 = vmatpush.xpose.msra.mxu0 0.0
    %434 = vmatpush.xpose.msra.mxu0 0.0
    %435 = vmatpush.xpose.msra.mxu0 0.0
    %436 = vmatpush.xpose.msra.mxu0 0.0
    %437 = vmatpush.xpose.msra.mxu0 0.0
    %438 = vmatpush.xpose.msra.mxu0 0.0
    %439 = vmatpush.xpose.msra.mxu0 0.0
    %440 = vmatpush.xpose.msra.mxu0 0.0
    %441 = vmatpush.xpose.msra.mxu0 0.0
    %442 = vmatpush.xpose.msra.mxu0 0.0
    %443 = vmatpush.xpose.msra.mxu0 0.0
    %444 = vmatpush.xpose.msra.mxu0 0.0
    %445 = vmatpush.xpose.msra.mxu0 0.0
    %446 = vmatpush.xpose.msra.mxu0 0.0
    %447 = vmatpush.xpose.msra.mxu0 %v430
    %448 = vmatmul.f32.gmra.mxu0 %v427
    %v449 = vpop.f32.mrf.mxu0
    %v450 = vadd.f32 %v198, %v449
    %451 = vdwg.mxu0
    %v453 = vsel %vm202, %v358, 0
    %v456 = vsel %vm202, %v391, 0
    %458 = vmatpush.xpose.msra.mxu0 0.0
    %459 = vmatpush.xpose.msra.mxu0 0.0
    %460 = vmatpush.xpose.msra.mxu0 0.0
    %461 = vmatpush.xpose.msra.mxu0 0.0
    %462 = vmatpush.xpose.msra.mxu0 0.0
    %463 = vmatpush.xpose.msra.mxu0 0.0
    %464 = vmatpush.xpose.msra.mxu0 0.0
    %465 = vmatpush.xpose.msra.mxu0 0.0
    %466 = vmatpush.xpose.msra.mxu0 0.0
    %467 = vmatpush.xpose.msra.mxu0 0.0
    %468 = vmatpush.xpose.msra.mxu0 0.0
    %469 = vmatpush.xpose.msra.mxu0 0.0
    %470 = vmatpush.xpose.msra.mxu0 0.0
    %471 = vmatpush.xpose.msra.mxu0 0.0
    %472 = vmatpush.xpose.msra.mxu0 0.0
    %473 = vmatpush.xpose.msra.mxu0 %v456
    %474 = vmatmul.f32.gmra.mxu0 %v453
    %v475 = vpop.f32.mrf.mxu0
    %v476 = vadd.f32 %v199, %v475
    %477 = vdwg.mxu0
    %v478 = vsel %vm255, %v450, -inf
    %479 = vmax.xlane.f32.xlu0 %v478
    %v480 = vpop.xlane.xlu0 %479
    %v481 = vsel %vm255, %v476, -inf
    %482 = vmax.xlane.f32.xlu0 %v481
    %v483 = vpop.xlane.xlu0 %482
    %v484 = vsub.f32 %v450, %v480
    %v485 = vsub.f32 %v476, %v483
    %v486 = vmul.f32 %v484, 1.442695
    %v487 = vpow.pop %v486
    %v488 = vmul.f32 %v485, 1.442695
    %v489 = vpow.pop %v488
    %v490 = vsel %vm255, %v487, 0.0
    %491 = vadd.xlane.f32.xlu0 %v490
    %v492 = vpop.xlane.xlu0 %491
    %v493 = vsel %vm255, %v489, 0.0
    %494 = vadd.xlane.f32.xlu0 %v493
    %v495 = vpop.xlane.xlu0 %494
    %v496 = vrcp.pop %v492
    %v497 = vrcp.pop %v495
    %v498 = vmul.f32 %v487, %v496
    %v499 = vmul.f32 %v489, %v497
    %v501 = vsel %vm255, %v498, 0
    %503 = vmatpush.msra.mxu0 0.0
    %504 = vmatpush.msra.mxu0 0.0
    %505 = vmatpush.msra.mxu0 0.0
    %506 = vmatpush.msra.mxu0 0.0
    %507 = vmatpush.msra.mxu0 0.0
    %508 = vmatpush.msra.mxu0 0.0
    %509 = vmatpush.msra.mxu0 0.0
    %510 = vmatpush.msra.mxu0 0.0
    %511 = vmatpush.msra.mxu0 0.0
    %512 = vmatpush.msra.mxu0 0.0
    %513 = vmatpush.msra.mxu0 0.0
    %514 = vmatpush.msra.mxu0 0.0
    %515 = vmatpush.msra.mxu0 0.0
    %516 = vmatpush.msra.mxu0 0.0
    %517 = vmatpush.msra.mxu0 0.0
    %518 = vmatpush.msra.mxu0 %v422
    %519 = vmatmul.f32.gmra.mxu0 %v501
    %v520 = vpop.f32.mrf.mxu0
    %v521 = vadd.f32 0.0, %v520
    %522 = vdwg.mxu0
    %v524 = vsel %vm255, %v499, 0
    %526 = vmatpush.msra.mxu0 0.0
    %527 = vmatpush.msra.mxu0 0.0
    %528 = vmatpush.msra.mxu0 0.0
    %529 = vmatpush.msra.mxu0 0.0
    %530 = vmatpush.msra.mxu0 0.0
    %531 = vmatpush.msra.mxu0 0.0
    %532 = vmatpush.msra.mxu0 0.0
    %533 = vmatpush.msra.mxu0 0.0
    %534 = vmatpush.msra.mxu0 0.0
    %535 = vmatpush.msra.mxu0 0.0
    %536 = vmatpush.msra.mxu0 0.0
    %537 = vmatpush.msra.mxu0 0.0
    %538 = vmatpush.msra.mxu0 0.0
    %539 = vmatpush.msra.mxu0 0.0
    %540 = vmatpush.msra.mxu0 0.0
    %541 = vmatpush.msra.mxu0 %v424
    %542 = vmatmul.f32.gmra.mxu0 %v524
    %v543 = vpop.f32.mrf.mxu0
    %v544 = vadd.f32 0.0, %v543
    %545 = vdwg.mxu0
    %v546 = vpack.c.bf16 %v544, %v521
    %s547 = scalar_lea.vmem %s3, 8
    %v548 = vld [vmem:[%s547] sm:$0xf]
    %v549 = vld [vmem:[%s547 + $0x4] sm:$0xf]
    %v552 = vunpack.c.l.b16 %v548
    %v553 = vunpack.c.l.b16 %v549
    %v554 = vpack.c.b16 %v553, %v552
    %v557 = vsel %vm202, %v546, 0
    %559 = vmatpush.bf16.msra.mxu0 0
    %560 = vmatpush.bf16.msra.mxu0 0
    %561 = vmatpush.bf16.msra.mxu0 0
    %562 = vmatpush.bf16.msra.mxu0 0
    %563 = vmatpush.bf16.msra.mxu0 0
    %564 = vmatpush.bf16.msra.mxu0 0
    %565 = vmatpush.bf16.msra.mxu0 0
    %566 = vmatpush.bf16.msra.mxu0 %v554
    %567 = vmatmul.bf16.gmra.mxu0 %v557
    %v568 = vpop.f32.mrf.mxu0
    %v569 = vadd.f32 0.0, %v568
    %v570 = vpop.f32.mrf.mxu0
    %v571 = vadd.f32 0.0, %v570
    %572 = vdwg.mxu0
    %v575 = vunpack.c.l.b16 %v325
    %v576 = vunpack.c.l.b16 %v326
    %v577 = vpack.c.b16 %v576, %v575
    %v580 = vsel %vm202, %v324, 0
    %582 = vmatpush.bf16.msra.mxu0 0
    %583 = vmatpush.bf16.msra.mxu0 0
    %584 = vmatpush.bf16.msra.mxu0 0
    %585 = vmatpush.bf16.msra.mxu0 0
    %586 = vmatpush.bf16.msra.mxu0 0
    %587 = vmatpush.bf16.msra.mxu0 0
    %588 = vmatpush.bf16.msra.mxu0 0
    %589 = vmatpush.bf16.msra.mxu0 %v577
    %590 = vmatmul.bf16.gmra.mxu0 %v580
    %v591 = vpop.f32.mrf.mxu0
    %v592 = vadd.f32 %v569, %v591
    %v593 = vpop.f32.mrf.mxu0
    %v594 = vadd.f32 %v571, %v593
    %595 = vdwg.mxu0
    %v596 = vld [vmem:[%s5 + $0x6] sm:$0x1]
    %v597 = vperm.slane %v596, 0
    %v598 = vadd.f32 %v592, %v597
    %v599 = vadd.f32 %v594, %v597
    %v600 = vadd.f32 %v91, %v598
    %v601 = vadd.f32 %v92, %v599
    %v602 = vld [vmem:[%s5 + $0x7] sm:$0x1]
    %v603 = vld [vmem:[%s5 + $0x8] sm:$0x1]
    %v604 = vsel %vm35, %v600, 0.0
    %605 = vadd.xlane.f32.xlu0 %v604
    %v606 = vpop.xlane.xlu0 %605
    %v607 = vsel %vm35, %v601, 0.0
    %608 = vadd.xlane.f32.xlu0 %v607
    %v609 = vpop.xlane.xlu0 %608
    %v610 = vmul.f32 %v606, %v48
    %v611 = vmul.f32 %v609, %v48
    %v612 = vsub.f32 %v600, %v610
    %v613 = vsub.f32 %v601, %v611
    %v614 = vmul.f32 %v612, %v612
    %v615 = vmul.f32 %v613, %v613
    %v616 = vsel %vm35, %v614, 0.0
    %617 = vadd.xlane.f32.xlu0 %v616
    %v618 = vpop.xlane.xlu0 %617
    %v619 = vsel %vm35, %v615, 0.0
    %620 = vadd.xlane.f32.xlu0 %v619
    %v621 = vpop.xlane.xlu0 %620
    %v622 = vmul.f32 %v618, %v48
    %v623 = vmul.f32 %v621, %v48
    %v624 = vadd.f32 %v622, 1e-12
    %v625 = vadd.f32 %v623, 1e-12
    %v626 = vrsqrt.pop %v624
    %v627 = vmul.f32 %v626, %v624
    %v628 = vmul.f32 %v627, %v626
    %v629 = vmul.f32 0.5, %v628
    %v630 = vsub.f32 1.5, %v629
    %v631 = vmul.f32 %v626, %v630
    %vm632 = vweird.f32 %v624
    %vm633 = vweird.f32 %v626
    %vm634 = vmor %vm632, %vm633
    %v635 = vsel %vm634, %v626, %v631
    %v636 = vrsqrt.pop %v625
    %v637 = vmul.f32 %v636, %v625
    %v638 = vmul.f32 %v637, %v636
    %v639 = vmul.f32 0.5, %v638
    %v640 = vsub.f32 1.5, %v639
    %v641 = vmul.f32 %v636, %v640
    %vm642 = vweird.f32 %v625
    %vm643 = vweird.f32 %v636
    %vm644 = vmor %vm642, %vm643
    %v645 = vsel %vm644, %v636, %v641
    %v646 = vmul.f32 %v612, %v635
    %v647 = vmul.f32 %v613, %v645
    %v648 = vperm.slane %v602, 0
    %v649 = vmul.f32 %v646, %v648
    %v650 = vmul.f32 %v647, %v648
    %v651 = vperm.slane %v603, 0
    %v652 = vadd.f32 %v649, %v651
    %v653 = vadd.f32 %v650, %v651
    %v654 = vpack.c.bf16 %v653, %v652
    %v655 = vld [vmem:[%s4] sm:$0xf]
    %v656 = vld [vmem:[%s4 + $0x4] sm:$0xf]
    %v657 = vld [vmem:[%s4 + $0x8] sm:$0xf]
    %v658 = vld [vmem:[%s4 + $0xc] sm:$0xf]
    %v659 = vld [vmem:[%s5 + $0x9] sm:$0x1]
    %v660 = vperm.slane %v659, 0
    %v665 = vunpack.c.l.b16 %v655
    %v666 = vunpack.c.l.b16 %v656
    %v667 = vunpack.c.l.b16 %v657
    %v668 = vunpack.c.l.b16 %v658
    %v669 = vpack.c.b16 %v666, %v665
    %v670 = vpack.c.b16 %v668, %v667
    %v674 = vsel %vm35, %v654, 0
    %676 = vmatpush.bf16.msra.mxu0 0
    %677 = vmatpush.bf16.msra.mxu0 0
    %678 = vmatpush.bf16.msra.mxu0 0
    %679 = vmatpush.bf16.msra.mxu0 0
    %680 = vmatpush.bf16.msra.mxu0 0
    %681 = vmatpush.bf16.msra.mxu0 0
    %682 = vmatpush.bf16.msra.mxu0 %v670
    %683 = vmatpush.bf16.msra.mxu0 %v669
    %684 = vmatmul.bf16.gmra.mxu0 %v674
    %v685 = vpop.f32.mrf.mxu0
    %v686 = vadd.f32 %v660, %v685
    %v687 = vpop.f32.mrf.mxu0
    %v688 = vadd.f32 %v660, %v687
    %689 = vdwg.mxu0
    %v690 = vmul.f32 %v686, 0.5
    %v691 = vmul.f32 %v688, 0.5
    %v692 = vmul.f32 %v686, 0.044715
    %v693 = vmul.f32 %v688, 0.044715
    %v694 = vmul.f32 %v692, %v686
    %v695 = vmul.f32 %v693, %v688
    %v696 = vmul.f32 %v694, %v686
    %v697 = vmul.f32 %v695, %v688
    %v698 = vadd.f32 %v686, %v696
    %v699 = vadd.f32 %v688, %v697
    %v700 = vmul.f32 %v698, 0.7978846
    %v701 = vmul.f32 %v699, 0.7978846
    %v702 = vtanh.pop %v700
    %v703 = vtanh.pop %v701
    %v704 = vadd.f32 %v702, 1.0
    %v705 = vadd.f32 %v703, 1.0
    %v706 = vmul.f32 %v690, %v704
    %v707 = vmul.f32 %v691, %v705
    %v708 = vpack.c.bf16 %v707, %v706
    %s709 = scalar_lea.vmem %s4, 32
    %v710 = vld [vmem:[%s709] sm:$0xf]
    %v711 = vld [vmem:[%s709 + $0x4] sm:$0xf]
    %v712 = vld [vmem:[%s709 + $0x8] sm:$0xf]
    %v713 = vld [vmem:[%s709 + $0xc] sm:$0xf]
    %v714 = vld [vmem:[%s709 + $0x10] sm:$0xf]
    %v715 = vld [vmem:[%s709 + $0x14] sm:$0xf]
    %v716 = vld [vmem:[%s709 + $0x18] sm:$0xf]
    %v717 = vld [vmem:[%s709 + $0x1c] sm:$0xf]
    %v718 = vld [vmem:[%s5 + $0xa] sm:$0x1]
    %v719 = vperm.slane %v718, 0
    %v728 = vunpack.c.l.b16 %v710
    %v729 = vunpack.c.l.b16 %v711
    %v730 = vunpack.c.l.b16 %v712
    %v731 = vunpack.c.l.b16 %v713
    %v732 = vunpack.c.l.b16 %v714
    %v733 = vunpack.c.l.b16 %v715
    %v734 = vunpack.c.l.b16 %v716
    %v735 = vunpack.c.l.b16 %v717
    %v736 = vpack.c.b16 %v729, %v728
    %v737 = vpack.c.b16 %v731, %v730
    %v738 = vpack.c.b16 %v733, %v732
    %v739 = vpack.c.b16 %v735, %v734
    %vm744 = vcmask 523264
    %v746 = vsel %vm744, %v708, 0
    %748 = vmatpush.bf16.msra.mxu0 0
    %749 = vmatpush.bf16.msra.mxu0 0
    %750 = vmatpush.bf16.msra.mxu0 0
    %751 = vmatpush.bf16.msra.mxu0 0
    %752 = vmatpush.bf16.msra.mxu0 %v739
    %753 = vmatpush.bf16.msra.mxu0 %v738
    %754 = vmatpush.bf16.msra.mxu0 %v737
    %755 = vmatpush.bf16.msra.mxu0 %v736
    %756 = vmatmul.bf16.gmra.mxu0 %v746
    %v757 = vpop.f32.mrf.mxu0
    %v758 = vadd.f32 %v719, %v757
    %v759 = vpop.f32.mrf.mxu0
    %v760 = vadd.f32 %v719, %v759
    %761 = vdwg.mxu0
    %v762 = vadd.f32 %v652, %v758
    %v763 = vadd.f32 %v653, %v760
    %v764 = vld [vmem:[%s5 + $0xb] sm:$0x1]
    %v765 = vld [vmem:[%s5 + $0xc] sm:$0x1]
    %v766 = vsel %vm35, %v762, 0.0
    %767 = vadd.xlane.f32.xlu0 %v766
    %v768 = vpop.xlane.xlu0 %767
    %v769 = vsel %vm35, %v763, 0.0
    %770 = vadd.xlane.f32.xlu0 %v769
    %v771 = vpop.xlane.xlu0 %770
    %v772 = vmul.f32 %v768, %v48
    %v773 = vmul.f32 %v771, %v48
    %v774 = vsub.f32 %v762, %v772
    %v775 = vsub.f32 %v763, %v773
    %v776 = vmul.f32 %v774, %v774
    %v777 = vmul.f32 %v775, %v775
    %v778 = vsel %vm35, %v776, 0.0
    %779 = vadd.xlane.f32.xlu0 %v778
    %v780 = vpop.xlane.xlu0 %779
    %v781 = vsel %vm35, %v777, 0.0
    %782 = vadd.xlane.f32.xlu0 %v781
    %v783 = vpop.xlane.xlu0 %782
    %v784 = vmul.f32 %v780, %v48
    %v785 = vmul.f32 %v783, %v48
    %v786 = vadd.f32 %v784, 1e-12
    %v787 = vadd.f32 %v785, 1e-12
    %v788 = vrsqrt.pop %v786
    %v789 = vmul.f32 %v788, %v786
    %v790 = vmul.f32 %v789, %v788
    %v791 = vmul.f32 0.5, %v790
    %v792 = vsub.f32 1.5, %v791
    %v793 = vmul.f32 %v788, %v792
    %vm794 = vweird.f32 %v786
    %vm795 = vweird.f32 %v788
    %vm796 = vmor %vm794, %vm795
    %v797 = vsel %vm796, %v788, %v793
    %v798 = vrsqrt.pop %v787
    %v799 = vmul.f32 %v798, %v787
    %v800 = vmul.f32 %v799, %v798
    %v801 = vmul.f32 0.5, %v800
    %v802 = vsub.f32 1.5, %v801
    %v803 = vmul.f32 %v798, %v802
    %vm804 = vweird.f32 %v787
    %vm805 = vweird.f32 %v798
    %vm806 = vmor %vm804, %vm805
    %v807 = vsel %vm806, %v798, %v803
    %v808 = vmul.f32 %v774, %v797
    %v809 = vmul.f32 %v775, %v807
    %v810 = vperm.slane %v764, 0
    %v811 = vmul.f32 %v808, %v810
    %v812 = vmul.f32 %v809, %v810
    %v813 = vperm.slane %v765, 0
    %v814 = vadd.f32 %v811, %v813
    %v815 = vadd.f32 %v812, %v813
    %v816 = vpack.c.bf16 %v815, %v814
    %s817 = scalar_lea.vmem %s2, 96
    %v818 = vld [vmem:[%s817] sm:$0xf]
    %v819 = vld [vmem:[%s817 + $0x4] sm:$0xf]
    %v820 = vld [vmem:[%s817 + $0x8] sm:$0xf]
    %v821 = vld [vmem:[%s817 + $0xc] sm:$0xf]
    %s822 = scalar_lea.vmem %s5, 16
    %v823 = vld [vmem:[%s822] sm:$0x1]
    %v824 = vperm.slane %v823, 0
    %v829 = vunpack.c.l.b16 %v818
    %v830 = vunpack.c.l.b16 %v819
    %v831 = vunpack.c.l.b16 %v820
    %v832 = vunpack.c.l.b16 %v821
    %v833 = vpack.c.b16 %v830, %v829
    %v834 = vpack.c.b16 %v832, %v831
    %v838 = vsel %vm35, %v816, 0
    %840 = vmatpush.bf16.msra.mxu0 0
    %841 = vmatpush.bf16.msra.mxu0 0
    %842 = vmatpush.bf16.msra.mxu0 0
    %843 = vmatpush.bf16.msra.mxu0 0
    %844 = vmatpush.bf16.msra.mxu0 0
    %845 = vmatpush.bf16.msra.mxu0 0
    %846 = vmatpush.bf16.msra.mxu0 %v834
    %847 = vmatpush.bf16.msra.mxu0 %v833
    %848 = vmatmul.bf16.gmra.mxu0 %v838
    %v849 = vpop.f32.mrf.mxu0
    %v850 = vadd.f32 %v824, %v849
    %v851 = vpop.f32.mrf.mxu0
    %v852 = vadd.f32 %v824, %v851
    %853 = vdwg.mxu0
    %s854 = scalar_lea.vmem %s2, 128
    %v855 = vld [vmem:[%s854] sm:$0xf]
    %v856 = vld [vmem:[%s854 + $0x4] sm:$0xf]
    %v857 = vld [vmem:[%s854 + $0x8] sm:$0xf]
    %v858 = vld [vmem:[%s854 + $0xc] sm:$0xf]
    %v859 = vld [vmem:[%s822 + $0x2] sm:$0x1]
    %v860 = vperm.slane %v859, 0
    %v865 = vunpack.c.l.b16 %v855
    %v866 = vunpack.c.l.b16 %v856
    %v867 = vunpack.c.l.b16 %v857
    %v868 = vunpack.c.l.b16 %v858
    %v869 = vpack.c.b16 %v866, %v865
    %v870 = vpack.c.b16 %v868, %v867
    %873 = vmatpush.bf16.msra.mxu0 0
    %874 = vmatpush.bf16.msra.mxu0 0
    %875 = vmatpush.bf16.msra.mxu0 0
    %876 = vmatpush.bf16.msra.mxu0 0
    %877 = vmatpush.bf16.msra.mxu0 0
    %878 = vmatpush.bf16.msra.mxu0 0
    %879 = vmatpush.bf16.msra.mxu0 %v870
    %880 = vmatpush.bf16.msra.mxu0 %v869
    %881 = vmatmul.bf16.gmra.mxu0 %v838
    %v882 = vpop.f32.mrf.mxu0
    %v883 = vadd.f32 %v860, %v882
    %v884 = vpop.f32.mrf.mxu0
    %v885 = vadd.f32 %v860, %v884
    %886 = vdwg.mxu0
    %s887 = scalar_lea.vmem %s2, 160
    %v888 = vld [vmem:[%s887] sm:$0xf]
    %v889 = vld [vmem:[%s887 + $0x4] sm:$0xf]
    %v890 = vld [vmem:[%s887 + $0x8] sm:$0xf]
    %v891 = vld [vmem:[%s887 + $0xc] sm:$0xf]
    %v892 = vld [vmem:[%s822 + $0x4] sm:$0x1]
    %v893 = vperm.slane %v892, 0
    %v898 = vunpack.c.l.b16 %v888
    %v899 = vunpack.c.l.b16 %v889
    %v900 = vunpack.c.l.b16 %v890
    %v901 = vunpack.c.l.b16 %v891
    %v902 = vpack.c.b16 %v899, %v898
    %v903 = vpack.c.b16 %v901, %v900
    %906 = vmatpush.bf16.msra.mxu0 0
    %907 = vmatpush.bf16.msra.mxu0 0
    %908 = vmatpush.bf16.msra.mxu0 0
    %909 = vmatpush.bf16.msra.mxu0 0
    %910 = vmatpush.bf16.msra.mxu0 0
    %911 = vmatpush.bf16.msra.mxu0 0
    %912 = vmatpush.bf16.msra.mxu0 %v903
    %913 = vmatpush.bf16.msra.mxu0 %v902
    %914 = vmatmul.bf16.gmra.mxu0 %v838
    %v915 = vpop.f32.mrf.mxu0
    %v916 = vadd.f32 %v893, %v915
    %v917 = vpop.f32.mrf.mxu0
    %v918 = vadd.f32 %v893, %v917
    %919 = vdwg.mxu0
    %v921 = vsel %vm202, %v850, 0
    %v924 = vsel %vm202, %v883, 0
    %926 = vmatpush.xpose.msra.mxu0 0.0
    %927 = vmatpush.xpose.msra.mxu0 0.0
    %928 = vmatpush.xpose.msra.mxu0 0.0
    %929 = vmatpush.xpose.msra.mxu0 0.0
    %930 = vmatpush.xpose.msra.mxu0 0.0
    %931 = vmatpush.xpose.msra.mxu0 0.0
    %932 = vmatpush.xpose.msra.mxu0 0.0
    %933 = vmatpush.xpose.msra.mxu0 0.0
    %934 = vmatpush.xpose.msra.mxu0 0.0
    %935 = vmatpush.xpose.msra.mxu0 0.0
    %936 = vmatpush.xpose.msra.mxu0 0.0
    %937 = vmatpush.xpose.msra.mxu0 0.0
    %938 = vmatpush.xpose.msra.mxu0 0.0
    %939 = vmatpush.xpose.msra.mxu0 0.0
    %940 = vmatpush.xpose.msra.mxu0 0.0
    %941 = vmatpush.xpose.msra.mxu0 %v924
    %942 = vmatmul.f32.gmra.mxu0 %v921
    %v943 = vpop.f32.mrf.mxu0
    %v944 = vadd.f32 %v198, %v943
    %945 = vdwg.mxu0
    %v947 = vsel %vm202, %v852, 0
    %v950 = vsel %vm202, %v885, 0
    %952 = vmatpush.xpose.msra.mxu0 0.0
    %953 = vmatpush.xpose.msra.mxu0 0.0
    %954 = vmatpush.xpose.msra.mxu0 0.0
    %955 = vmatpush.xpose.msra.mxu0 0.0
    %956 = vmatpush.xpose.msra.mxu0 0.0
    %957 = vmatpush.xpose.msra.mxu0 0.0
    %958 = vmatpush.xpose.msra.mxu0 0.0
    %959 = vmatpush.xpose.msra.mxu0 0.0
    %960 = vmatpush.xpose.msra.mxu0 0.0
    %961 = vmatpush.xpose.msra.mxu0 0.0
    %962 = vmatpush.xpose.msra.mxu0 0.0
    %963 = vmatpush.xpose.msra.mxu0 0.0
    %964 = vmatpush.xpose.msra.mxu0 0.0
    %965 = vmatpush.xpose.msra.mxu0 0.0
    %966 = vmatpush.xpose.msra.mxu0 0.0
    %967 = vmatpush.xpose.msra.mxu0 %v950
    %968 = vmatmul.f32.gmra.mxu0 %v947
    %v969 = vpop.f32.mrf.mxu0
    %v970 = vadd.f32 %v199, %v969
    %971 = vdwg.mxu0
    %v972 = vsel %vm255, %v944, -inf
    %973 = vmax.xlane.f32.xlu0 %v972
    %v974 = vpop.xlane.xlu0 %973
    %v975 = vsel %vm255, %v970, -inf
    %976 = vmax.xlane.f32.xlu0 %v975
    %v977 = vpop.xlane.xlu0 %976
    %v978 = vsub.f32 %v944, %v974
    %v979 = vsub.f32 %v970, %v977
    %v980 = vmul.f32 %v978, 1.442695
    %v981 = vpow.pop %v980
    %v982 = vmul.f32 %v979, 1.442695
    %v983 = vpow.pop %v982
    %v984 = vsel %vm255, %v981, 0.0
    %985 = vadd.xlane.f32.xlu0 %v984
    %v986 = vpop.xlane.xlu0 %985
    %v987 = vsel %vm255, %v983, 0.0
    %988 = vadd.xlane.f32.xlu0 %v987
    %v989 = vpop.xlane.xlu0 %988
    %v990 = vrcp.pop %v986
    %v991 = vrcp.pop %v989
    %v992 = vmul.f32 %v981, %v990
    %v993 = vmul.f32 %v983, %v991
    %v995 = vsel %vm255, %v992, 0
    %997 = vmatpush.msra.mxu0 0.0
    %998 = vmatpush.msra.mxu0 0.0
    %999 = vmatpush.msra.mxu0 0.0
    %1000 = vmatpush.msra.mxu0 0.0
    %1001 = vmatpush.msra.mxu0 0.0
    %1002 = vmatpush.msra.mxu0 0.0
    %1003 = vmatpush.msra.mxu0 0.0
    %1004 = vmatpush.msra.mxu0 0.0
    %1005 = vmatpush.msra.mxu0 0.0
    %1006 = vmatpush.msra.mxu0 0.0
    %1007 = vmatpush.msra.mxu0 0.0
    %1008 = vmatpush.msra.mxu0 0.0
    %1009 = vmatpush.msra.mxu0 0.0
    %1010 = vmatpush.msra.mxu0 0.0
    %1011 = vmatpush.msra.mxu0 0.0
    %1012 = vmatpush.msra.mxu0 %v916
    %1013 = vmatmul.f32.gmra.mxu0 %v995
    %v1014 = vpop.f32.mrf.mxu0
    %v1015 = vadd.f32 0.0, %v1014
    %1016 = vdwg.mxu0
    %v1018 = vsel %vm255, %v993, 0
    %1020 = vmatpush.msra.mxu0 0.0
    %1021 = vmatpush.msra.mxu0 0.0
    %1022 = vmatpush.msra.mxu0 0.0
    %1023 = vmatpush.msra.mxu0 0.0
    %1024 = vmatpush.msra.mxu0 0.0
    %1025 = vmatpush.msra.mxu0 0.0
    %1026 = vmatpush.msra.mxu0 0.0
    %1027 = vmatpush.msra.mxu0 0.0
    %1028 = vmatpush.msra.mxu0 0.0
    %1029 = vmatpush.msra.mxu0 0.0
    %1030 = vmatpush.msra.mxu0 0.0
    %1031 = vmatpush.msra.mxu0 0.0
    %1032 = vmatpush.msra.mxu0 0.0
    %1033 = vmatpush.msra.mxu0 0.0
    %1034 = vmatpush.msra.mxu0 0.0
    %1035 = vmatpush.msra.mxu0 %v918
    %1036 = vmatmul.f32.gmra.mxu0 %v1018
    %v1037 = vpop.f32.mrf.mxu0
    %v1038 = vadd.f32 0.0, %v1037
    %1039 = vdwg.mxu0
    %v1040 = vpack.c.bf16 %v1038, %v1015
    %s1041 = scalar_lea.vmem %s3, 16
    %v1042 = vld [vmem:[%s1041] sm:$0xf]
    %v1043 = vld [vmem:[%s1041 + $0x4] sm:$0xf]
    %s1044 = scalar_lea.vmem %s2, 112
    %v1045 = vld [vmem:[%s1044] sm:$0xf]
    %v1046 = vld [vmem:[%s1044 + $0x4] sm:$0xf]
    %v1047 = vld [vmem:[%s1044 + $0x8] sm:$0xf]
    %v1048 = vld [vmem:[%s1044 + $0xc] sm:$0xf]
    %v1049 = vld [vmem:[%s822 + $0x1] sm:$0x1]
    %v1050 = vperm.slane %v1049, 0
    %v1055 = vunpack.c.l.b16 %v1045
    %v1056 = vunpack.c.l.b16 %v1046
    %v1057 = vunpack.c.l.b16 %v1047
    %v1058 = vunpack.c.l.b16 %v1048
    %v1059 = vpack.c.b16 %v1056, %v1055
    %v1060 = vpack.c.b16 %v1058, %v1057
    %1063 = vmatpush.bf16.msra.mxu0 0
    %1064 = vmatpush.bf16.msra.mxu0 0
    %1065 = vmatpush.bf16.msra.mxu0 0
    %1066 = vmatpush.bf16.msra.mxu0 0
    %1067 = vmatpush.bf16.msra.mxu0 0
    %1068 = vmatpush.bf16.msra.mxu0 0
    %1069 = vmatpush.bf16.msra.mxu0 %v1060
    %1070 = vmatpush.bf16.msra.mxu0 %v1059
    %1071 = vmatmul.bf16.gmra.mxu0 %v838
    %v1072 = vpop.f32.mrf.mxu0
    %v1073 = vadd.f32 %v1050, %v1072
    %v1074 = vpop.f32.mrf.mxu0
    %v1075 = vadd.f32 %v1050, %v1074
    %1076 = vdwg.mxu0
    %s1077 = scalar_lea.vmem %s2, 144
    %v1078 = vld [vmem:[%s1077] sm:$0xf]
    %v1079 = vld [vmem:[%s1077 + $0x4] sm:$0xf]
    %v1080 = vld [vmem:[%s1077 + $0x8] sm:$0xf]
    %v1081 = vld [vmem:[%s1077 + $0xc] sm:$0xf]
    %v1082 = vld [vmem:[%s822 + $0x3] sm:$0x1]
    %v1083 = vperm.slane %v1082, 0
    %v1088 = vunpack.c.l.b16 %v1078
    %v1089 = vunpack.c.l.b16 %v1079
    %v1090 = vunpack.c.l.b16 %v1080
    %v1091 = vunpack.c.l.b16 %v1081
    %v1092 = vpack.c.b16 %v1089, %v1088
    %v1093 = vpack.c.b16 %v1091, %v1090
    %1096 = vmatpush.bf16.msra.mxu0 0
    %1097 = vmatpush.bf16.msra.mxu0 0
    %1098 = vmatpush.bf16.msra.mxu0 0
    %1099 = vmatpush.bf16.msra.mxu0 0
    %1100 = vmatpush.bf16.msra.mxu0 0
    %1101 = vmatpush.bf16.msra.mxu0 0
    %1102 = vmatpush.bf16.msra.mxu0 %v1093
    %1103 = vmatpush.bf16.msra.mxu0 %v1092
    %1104 = vmatmul.bf16.gmra.mxu0 %v838
    %v1105 = vpop.f32.mrf.mxu0
    %v1106 = vadd.f32 %v1083, %v1105
    %v1107 = vpop.f32.mrf.mxu0
    %v1108 = vadd.f32 %v1083, %v1107
    %1109 = vdwg.mxu0
    %s1110 = scalar_lea.vmem %s2, 176
    %v1111 = vld [vmem:[%s1110] sm:$0xf]
    %v1112 = vld [vmem:[%s1110 + $0x4] sm:$0xf]
    %v1113 = vld [vmem:[%s1110 + $0x8] sm:$0xf]
    %v1114 = vld [vmem:[%s1110 + $0xc] sm:$0xf]
    %v1115 = vld [vmem:[%s822 + $0x5] sm:$0x1]
    %v1116 = vperm.slane %v1115, 0
    %v1121 = vunpack.c.l.b16 %v1111
    %v1122 = vunpack.c.l.b16 %v1112
    %v1123 = vunpack.c.l.b16 %v1113
    %v1124 = vunpack.c.l.b16 %v1114
    %v1125 = vpack.c.b16 %v1122, %v1121
    %v1126 = vpack.c.b16 %v1124, %v1123
    %1129 = vmatpush.bf16.msra.mxu0 0
    %1130 = vmatpush.bf16.msra.mxu0 0
    %1131 = vmatpush.bf16.msra.mxu0 0
    %1132 = vmatpush.bf16.msra.mxu0 0
    %1133 = vmatpush.bf16.msra.mxu0 0
    %1134 = vmatpush.bf16.msra.mxu0 0
    %1135 = vmatpush.bf16.msra.mxu0 %v1126
    %1136 = vmatpush.bf16.msra.mxu0 %v1125
    %1137 = vmatmul.bf16.gmra.mxu0 %v838
    %v1138 = vpop.f32.mrf.mxu0
    %v1139 = vadd.f32 %v1116, %v1138
    %v1140 = vpop.f32.mrf.mxu0
    %v1141 = vadd.f32 %v1116, %v1140
    %1142 = vdwg.mxu0
    %v1144 = vsel %vm202, %v1073, 0
    %v1147 = vsel %vm202, %v1106, 0
    %1149 = vmatpush.xpose.msra.mxu0 0.0
    %1150 = vmatpush.xpose.msra.mxu0 0.0
    %1151 = vmatpush.xpose.msra.mxu0 0.0
    %1152 = vmatpush.xpose.msra.mxu0 0.0
    %1153 = vmatpush.xpose.msra.mxu0 0.0
    %1154 = vmatpush.xpose.msra.mxu0 0.0
    %1155 = vmatpush.xpose.msra.mxu0 0.0
    %1156 = vmatpush.xpose.msra.mxu0 0.0
    %1157 = vmatpush.xpose.msra.mxu0 0.0
    %1158 = vmatpush.xpose.msra.mxu0 0.0
    %1159 = vmatpush.xpose.msra.mxu0 0.0
    %1160 = vmatpush.xpose.msra.mxu0 0.0
    %1161 = vmatpush.xpose.msra.mxu0 0.0
    %1162 = vmatpush.xpose.msra.mxu0 0.0
    %1163 = vmatpush.xpose.msra.mxu0 0.0
    %1164 = vmatpush.xpose.msra.mxu0 %v1147
    %1165 = vmatmul.f32.gmra.mxu0 %v1144
    %v1166 = vpop.f32.mrf.mxu0
    %v1167 = vadd.f32 %v198, %v1166
    %1168 = vdwg.mxu0
    %v1170 = vsel %vm202, %v1075, 0
    %v1173 = vsel %vm202, %v1108, 0
    %1175 = vmatpush.xpose.msra.mxu0 0.0
    %1176 = vmatpush.xpose.msra.mxu0 0.0
    %1177 = vmatpush.xpose.msra.mxu0 0.0
    %1178 = vmatpush.xpose.msra.mxu0 0.0
    %1179 = vmatpush.xpose.msra.mxu0 0.0
    %1180 = vmatpush.xpose.msra.mxu0 0.0
    %1181 = vmatpush.xpose.msra.mxu0 0.0
    %1182 = vmatpush.xpose.msra.mxu0 0.0
    %1183 = vmatpush.xpose.msra.mxu0 0.0
    %1184 = vmatpush.xpose.msra.mxu0 0.0
    %1185 = vmatpush.xpose.msra.mxu0 0.0
    %1186 = vmatpush.xpose.msra.mxu0 0.0
    %1187 = vmatpush.xpose.msra.mxu0 0.0
    %1188 = vmatpush.xpose.msra.mxu0 0.0
    %1189 = vmatpush.xpose.msra.mxu0 0.0
    %1190 = vmatpush.xpose.msra.mxu0 %v1173
    %1191 = vmatmul.f32.gmra.mxu0 %v1170
    %v1192 = vpop.f32.mrf.mxu0
    %v1193 = vadd.f32 %v199, %v1192
    %1194 = vdwg.mxu0
    %v1195 = vsel %vm255, %v1167, -inf
    %1196 = vmax.xlane.f32.xlu0 %v1195
    %v1197 = vpop.xlane.xlu0 %1196
    %v1198 = vsel %vm255, %v1193, -inf
    %1199 = vmax.xlane.f32.xlu0 %v1198
    %v1200 = vpop.xlane.xlu0 %1199
    %v1201 = vsub.f32 %v1167, %v1197
    %v1202 = vsub.f32 %v1193, %v1200
    %v1203 = vmul.f32 %v1201, 1.442695
    %v1204 = vpow.pop %v1203
    %v1205 = vmul.f32 %v1202, 1.442695
    %v1206 = vpow.pop %v1205
    %v1207 = vsel %vm255, %v1204, 0.0
    %1208 = vadd.xlane.f32.xlu0 %v1207
    %v1209 = vpop.xlane.xlu0 %1208
    %v1210 = vsel %vm255, %v1206, 0.0
    %1211 = vadd.xlane.f32.xlu0 %v1210
    %v1212 = vpop.xlane.xlu0 %1211
    %v1213 = vrcp.pop %v1209
    %v1214 = vrcp.pop %v1212
    %v1215 = vmul.f32 %v1204, %v1213
    %v1216 = vmul.f32 %v1206, %v1214
    %v1218 = vsel %vm255, %v1215, 0
    %1220 = vmatpush.msra.mxu0 0.0
    %1221 = vmatpush.msra.mxu0 0.0
    %1222 = vmatpush.msra.mxu0 0.0
    %1223 = vmatpush.msra.mxu0 0.0
    %1224 = vmatpush.msra.mxu0 0.0
    %1225 = vmatpush.msra.mxu0 0.0
    %1226 = vmatpush.msra.mxu0 0.0
    %1227 = vmatpush.msra.mxu0 0.0
    %1228 = vmatpush.msra.mxu0 0.0
    %1229 = vmatpush.msra.mxu0 0.0
    %1230 = vmatpush.msra.mxu0 0.0
    %1231 = vmatpush.msra.mxu0 0.0
    %1232 = vmatpush.msra.mxu0 0.0
    %1233 = vmatpush.msra.mxu0 0.0
    %1234 = vmatpush.msra.mxu0 0.0
    %1235 = vmatpush.msra.mxu0 %v1139
    %1236 = vmatmul.f32.gmra.mxu0 %v1218
    %v1237 = vpop.f32.mrf.mxu0
    %v1238 = vadd.f32 0.0, %v1237
    %1239 = vdwg.mxu0
    %v1241 = vsel %vm255, %v1216, 0
    %1243 = vmatpush.msra.mxu0 0.0
    %1244 = vmatpush.msra.mxu0 0.0
    %1245 = vmatpush.msra.mxu0 0.0
    %1246 = vmatpush.msra.mxu0 0.0
    %1247 = vmatpush.msra.mxu0 0.0
    %1248 = vmatpush.msra.mxu0 0.0
    %1249 = vmatpush.msra.mxu0 0.0
    %1250 = vmatpush.msra.mxu0 0.0
    %1251 = vmatpush.msra.mxu0 0.0
    %1252 = vmatpush.msra.mxu0 0.0
    %1253 = vmatpush.msra.mxu0 0.0
    %1254 = vmatpush.msra.mxu0 0.0
    %1255 = vmatpush.msra.mxu0 0.0
    %1256 = vmatpush.msra.mxu0 0.0
    %1257 = vmatpush.msra.mxu0 0.0
    %1258 = vmatpush.msra.mxu0 %v1141
    %1259 = vmatmul.f32.gmra.mxu0 %v1241
    %v1260 = vpop.f32.mrf.mxu0
    %v1261 = vadd.f32 0.0, %v1260
    %1262 = vdwg.mxu0
    %v1263 = vpack.c.bf16 %v1261, %v1238
    %s1264 = scalar_lea.vmem %s3, 24
    %v1265 = vld [vmem:[%s1264] sm:$0xf]
    %v1266 = vld [vmem:[%s1264 + $0x4] sm:$0xf]
    %v1269 = vunpack.c.l.b16 %v1265
    %v1270 = vunpack.c.l.b16 %v1266
    %v1271 = vpack.c.b16 %v1270, %v1269
    %v1274 = vsel %vm202, %v1263, 0
    %1276 = vmatpush.bf16.msra.mxu0 0
    %1277 = vmatpush.bf16.msra.mxu0 0
    %1278 = vmatpush.bf16.msra.mxu0 0
    %1279 = vmatpush.bf16.msra.mxu0 0
    %1280 = vmatpush.bf16.msra.mxu0 0
    %1281 = vmatpush.bf16.msra.mxu0 0
    %1282 = vmatpush.bf16.msra.mxu0 0
    %1283 = vmatpush.bf16.msra.mxu0 %v1271
    %1284 = vmatmul.bf16.gmra.mxu0 %v1274
    %v1285 = vpop.f32.mrf.mxu0
    %v1286 = vadd.f32 0.0, %v1285
    %v1287 = vpop.f32.mrf.mxu0
    %v1288 = vadd.f32 0.0, %v1287
    %1289 = vdwg.mxu0
    %v1292 = vunpack.c.l.b16 %v1042
    %v1293 = vunpack.c.l.b16 %v1043
    %v1294 = vpack.c.b16 %v1293, %v1292
    %v1297 = vsel %vm202, %v1040, 0
    %1299 = vmatpush.bf16.msra.mxu0 0
    %1300 = vmatpush.bf16.msra.mxu0 0
    %1301 = vmatpush.bf16.msra.mxu0 0
    %1302 = vmatpush.bf16.msra.mxu0 0
    %1303 = vmatpush.bf16.msra.mxu0 0
    %1304 = vmatpush.bf16.msra.mxu0 0
    %1305 = vmatpush.bf16.msra.mxu0 0
    %1306 = vmatpush.bf16.msra.mxu0 %v1294
    %1307 = vmatmul.bf16.gmra.mxu0 %v1297
    %v1308 = vpop.f32.mrf.mxu0
    %v1309 = vadd.f32 %v1286, %v1308
    %v1310 = vpop.f32.mrf.mxu0
    %v1311 = vadd.f32 %v1288, %v1310
    %1312 = vdwg.mxu0
    %v1313 = vld [vmem:[%s822 + $0x6] sm:$0x1]
    %v1314 = vperm.slane %v1313, 0
    %v1315 = vadd.f32 %v1309, %v1314
    %v1316 = vadd.f32 %v1311, %v1314
    %v1317 = vadd.f32 %v814, %v1315
    %v1318 = vadd.f32 %v815, %v1316
    %v1319 = vld [vmem:[%s822 + $0x7] sm:$0x1]
    %v1320 = vld [vmem:[%s822 + $0x8] sm:$0x1]
    %v1321 = vsel %vm35, %v1317, 0.0
    %1322 = vadd.xlane.f32.xlu0 %v1321
    %v1323 = vpop.xlane.xlu0 %1322
    %v1324 = vsel %vm35, %v1318, 0.0
    %1325 = vadd.xlane.f32.xlu0 %v1324
    %v1326 = vpop.xlane.xlu0 %1325
    %v1327 = vmul.f32 %v1323, %v48
    %v1328 = vmul.f32 %v1326, %v48
    %v1329 = vsub.f32 %v1317, %v1327
    %v1330 = vsub.f32 %v1318, %v1328
    %v1331 = vmul.f32 %v1329, %v1329
    %v1332 = vmul.f32 %v1330, %v1330
    %v1333 = vsel %vm35, %v1331, 0.0
    %1334 = vadd.xlane.f32.xlu0 %v1333
    %v1335 = vpop.xlane.xlu0 %1334
    %v1336 = vsel %vm35, %v1332, 0.0
    %1337 = vadd.xlane.f32.xlu0 %v1336
    %v1338 = vpop.xlane.xlu0 %1337
    %v1339 = vmul.f32 %v1335, %v48
    %v1340 = vmul.f32 %v1338, %v48
    %v1341 = vadd.f32 %v1339, 1e-12
    %v1342 = vadd.f32 %v1340, 1e-12
    %v1343 = vrsqrt.pop %v1341
    %v1344 = vmul.f32 %v1343, %v1341
    %v1345 = vmul.f32 %v1344, %v1343
    %v1346 = vmul.f32 0.5, %v1345
    %v1347 = vsub.f32 1.5, %v1346
    %v1348 = vmul.f32 %v1343, %v1347
    %vm1349 = vweird.f32 %v1341
    %vm1350 = vweird.f32 %v1343
    %vm1351 = vmor %vm1349, %vm1350
    %v1352 = vsel %vm1351, %v1343, %v1348
    %v1353 = vrsqrt.pop %v1342
    %v1354 = vmul.f32 %v1353, %v1342
    %v1355 = vmul.f32 %v1354, %v1353
    %v1356 = vmul.f32 0.5, %v1355
    %v1357 = vsub.f32 1.5, %v1356
    %v1358 = vmul.f32 %v1353, %v1357
    %vm1359 = vweird.f32 %v1342
    %vm1360 = vweird.f32 %v1353
    %vm1361 = vmor %vm1359, %vm1360
    %v1362 = vsel %vm1361, %v1353, %v1358
    %v1363 = vmul.f32 %v1329, %v1352
    %v1364 = vmul.f32 %v1330, %v1362
    %v1365 = vperm.slane %v1319, 0
    %v1366 = vmul.f32 %v1363, %v1365
    %v1367 = vmul.f32 %v1364, %v1365
    %v1368 = vperm.slane %v1320, 0
    %v1369 = vadd.f32 %v1366, %v1368
    %v1370 = vadd.f32 %v1367, %v1368
    %v1371 = vpack.c.bf16 %v1370, %v1369
    %s1372 = scalar_lea.vmem %s4, 64
    %v1373 = vld [vmem:[%s1372] sm:$0xf]
    %v1374 = vld [vmem:[%s1372 + $0x4] sm:$0xf]
    %v1375 = vld [vmem:[%s1372 + $0x8] sm:$0xf]
    %v1376 = vld [vmem:[%s1372 + $0xc] sm:$0xf]
    %v1377 = vld [vmem:[%s822 + $0x9] sm:$0x1]
    %v1378 = vperm.slane %v1377, 0
    %v1383 = vunpack.c.l.b16 %v1373
    %v1384 = vunpack.c.l.b16 %v1374
    %v1385 = vunpack.c.l.b16 %v1375
    %v1386 = vunpack.c.l.b16 %v1376
    %v1387 = vpack.c.b16 %v1384, %v1383
    %v1388 = vpack.c.b16 %v1386, %v1385
    %v1392 = vsel %vm35, %v1371, 0
    %1394 = vmatpush.bf16.msra.mxu0 0
    %1395 = vmatpush.bf16.msra.mxu0 0
    %1396 = vmatpush.bf16.msra.mxu0 0
    %1397 = vmatpush.bf16.msra.mxu0 0
    %1398 = vmatpush.bf16.msra.mxu0 0
    %1399 = vmatpush.bf16.msra.mxu0 0
    %1400 = vmatpush.bf16.msra.mxu0 %v1388
    %1401 = vmatpush.bf16.msra.mxu0 %v1387
    %1402 = vmatmul.bf16.gmra.mxu0 %v1392
    %v1403 = vpop.f32.mrf.mxu0
    %v1404 = vadd.f32 %v1378, %v1403
    %v1405 = vpop.f32.mrf.mxu0
    %v1406 = vadd.f32 %v1378, %v1405
    %1407 = vdwg.mxu0
    %v1408 = vmul.f32 %v1404, 0.5
    %v1409 = vmul.f32 %v1406, 0.5
    %v1410 = vmul.f32 %v1404, 0.044715
    %v1411 = vmul.f32 %v1406, 0.044715
    %v1412 = vmul.f32 %v1410, %v1404
    %v1413 = vmul.f32 %v1411, %v1406
    %v1414 = vmul.f32 %v1412, %v1404
    %v1415 = vmul.f32 %v1413, %v1406
    %v1416 = vadd.f32 %v1404, %v1414
    %v1417 = vadd.f32 %v1406, %v1415
    %v1418 = vmul.f32 %v1416, 0.7978846
    %v1419 = vmul.f32 %v1417, 0.7978846
    %v1420 = vtanh.pop %v1418
    %v1421 = vtanh.pop %v1419
    %v1422 = vadd.f32 %v1420, 1.0
    %v1423 = vadd.f32 %v1421, 1.0
    %v1424 = vmul.f32 %v1408, %v1422
    %v1425 = vmul.f32 %v1409, %v1423
    %v1426 = vpack.c.bf16 %v1425, %v1424
    %s1427 = scalar_lea.vmem %s4, 96
    %v1428 = vld [vmem:[%s1427] sm:$0xf]
    %v1429 = vld [vmem:[%s1427 + $0x4] sm:$0xf]
    %v1430 = vld [vmem:[%s1427 + $0x8] sm:$0xf]
    %v1431 = vld [vmem:[%s1427 + $0xc] sm:$0xf]
    %v1432 = vld [vmem:[%s1427 + $0x10] sm:$0xf]
    %v1433 = vld [vmem:[%s1427 + $0x14] sm:$0xf]
    %v1434 = vld [vmem:[%s1427 + $0x18] sm:$0xf]
    %v1435 = vld [vmem:[%s1427 + $0x1c] sm:$0xf]
    %v1436 = vld [vmem:[%s822 + $0xa] sm:$0x1]
    %v1437 = vperm.slane %v1436, 0
    %v1446 = vunpack.c.l.b16 %v1428
    %v1447 = vunpack.c.l.b16 %v1429
    %v1448 = vunpack.c.l.b16 %v1430
    %v1449 = vunpack.c.l.b16 %v1431
    %v1450 = vunpack.c.l.b16 %v1432
    %v1451 = vunpack.c.l.b16 %v1433
    %v1452 = vunpack.c.l.b16 %v1434
    %v1453 = vunpack.c.l.b16 %v1435
    %v1454 = vpack.c.b16 %v1447, %v1446
    %v1455 = vpack.c.b16 %v1449, %v1448
    %v1456 = vpack.c.b16 %v1451, %v1450
    %v1457 = vpack.c.b16 %v1453, %v1452
    %v1463 = vsel %vm744, %v1426, 0
    %1465 = vmatpush.bf16.msra.mxu0 0
    %1466 = vmatpush.bf16.msra.mxu0 0
    %1467 = vmatpush.bf16.msra.mxu0 0
    %1468 = vmatpush.bf16.msra.mxu0 0
    %1469 = vmatpush.bf16.msra.mxu0 %v1457
    %1470 = vmatpush.bf16.msra.mxu0 %v1456
    %1471 = vmatpush.bf16.msra.mxu0 %v1455
    %1472 = vmatpush.bf16.msra.mxu0 %v1454
    %1473 = vmatmul.bf16.gmra.mxu0 %v1463
    %v1474 = vpop.f32.mrf.mxu0
    %v1475 = vadd.f32 %v1437, %v1474
    %v1476 = vpop.f32.mrf.mxu0
    %v1477 = vadd.f32 %v1437, %v1476
    %1478 = vdwg.mxu0
    %v1479 = vadd.f32 %v1369, %v1475
    %v1480 = vadd.f32 %v1370, %v1477
    %v1481 = vld [vmem:[%s822 + $0xb] sm:$0x1]
    %v1482 = vld [vmem:[%s822 + $0xc] sm:$0x1]
    %v1483 = vsel %vm35, %v1479, 0.0
    %1484 = vadd.xlane.f32.xlu0 %v1483
    %v1485 = vpop.xlane.xlu0 %1484
    %v1486 = vsel %vm35, %v1480, 0.0
    %1487 = vadd.xlane.f32.xlu0 %v1486
    %v1488 = vpop.xlane.xlu0 %1487
    %v1489 = vmul.f32 %v1485, %v48
    %v1490 = vmul.f32 %v1488, %v48
    %v1491 = vsub.f32 %v1479, %v1489
    %v1492 = vsub.f32 %v1480, %v1490
    %v1493 = vmul.f32 %v1491, %v1491
    %v1494 = vmul.f32 %v1492, %v1492
    %v1495 = vsel %vm35, %v1493, 0.0
    %1496 = vadd.xlane.f32.xlu0 %v1495
    %v1497 = vpop.xlane.xlu0 %1496
    %v1498 = vsel %vm35, %v1494, 0.0
    %1499 = vadd.xlane.f32.xlu0 %v1498
    %v1500 = vpop.xlane.xlu0 %1499
    %v1501 = vmul.f32 %v1497, %v48
    %v1502 = vmul.f32 %v1500, %v48
    %v1503 = vadd.f32 %v1501, 1e-12
    %v1504 = vadd.f32 %v1502, 1e-12
    %v1505 = vrsqrt.pop %v1503
    %v1506 = vmul.f32 %v1505, %v1503
    %v1507 = vmul.f32 %v1506, %v1505
    %v1508 = vmul.f32 0.5, %v1507
    %v1509 = vsub.f32 1.5, %v1508
    %v1510 = vmul.f32 %v1505, %v1509
    %vm1511 = vweird.f32 %v1503
    %vm1512 = vweird.f32 %v1505
    %vm1513 = vmor %vm1511, %vm1512
    %v1514 = vsel %vm1513, %v1505, %v1510
    %v1515 = vrsqrt.pop %v1504
    %v1516 = vmul.f32 %v1515, %v1504
    %v1517 = vmul.f32 %v1516, %v1515
    %v1518 = vmul.f32 0.5, %v1517
    %v1519 = vsub.f32 1.5, %v1518
    %v1520 = vmul.f32 %v1515, %v1519
    %vm1521 = vweird.f32 %v1504
    %vm1522 = vweird.f32 %v1515
    %vm1523 = vmor %vm1521, %vm1522
    %v1524 = vsel %vm1523, %v1515, %v1520
    %v1525 = vmul.f32 %v1491, %v1514
    %v1526 = vmul.f32 %v1492, %v1524
    %v1527 = vperm.slane %v1481, 0
    %v1528 = vmul.f32 %v1525, %v1527
    %v1529 = vmul.f32 %v1526, %v1527
    %v1530 = vperm.slane %v1482, 0
    %v1531 = vadd.f32 %v1528, %v1530
    %v1532 = vadd.f32 %v1529, %v1530
    %v1533 = vpack.c.bf16 %v1531, %v1531
    %v1534 = vpack.c.bf16 %v1532, %v1532
    %v1535 = vld [vmem:[%s6] sm:$0xf]
    %v1536 = vld [vmem:[%s6 + $0x4] sm:$0xf]
    %v1537 = vld [vmem:[%s6 + $0x8] sm:$0xf]
    %v1538 = vld [vmem:[%s6 + $0xc] sm:$0xf]
    %v1539 = vld [vmem:[%s7 + $0x2] sm:$0x1]
    %v1540 = vperm.slane %v1539, 0
    %v1543 = vunpack.c.l.b16 %v1533
    %v1544 = vunpack.c.l.b16 %v1534
    %v1545 = vrot.slane %v1544, 7
    %vm1546 = vcmask 1041409
    %v1547 = vsel %vm1546, %v1545, %v1543
    %v1548 = vpack.c.b16 %v1547, %v1547
    %v1553 = vunpack.c.l.b16 %v1535
    %v1554 = vunpack.c.l.b16 %v1536
    %v1555 = vunpack.c.l.b16 %v1537
    %v1556 = vunpack.c.l.b16 %v1538
    %v1557 = vpack.c.b16 %v1554, %v1553
    %v1558 = vpack.c.b16 %v1556, %v1555
    %v1562 = vsel %vm35, %v1548, 0
    %1564 = vmatpush.bf16.msra.mxu0 0
    %1565 = vmatpush.bf16.msra.mxu0 0
    %1566 = vmatpush.bf16.msra.mxu0 0
    %1567 = vmatpush.bf16.msra.mxu0 0
    %1568 = vmatpush.bf16.msra.mxu0 0
    %1569 = vmatpush.bf16.msra.mxu0 0
    %1570 = vmatpush.bf16.msra.mxu0 %v1558
    %1571 = vmatpush.bf16.msra.mxu0 %v1557
    %1572 = vmatmul.bf16.gmra.mxu0 %v1562
    %v1573 = vpop.f32.mrf.mxu0
    %v1574 = vadd.f32 %v1540, %v1573
    %v1575 = vpop.f32.mrf.mxu0
    %1576 = vdwg.mxu0
    %v1577 = vtanh.pop %v1574
    %v1578 = vpack.c.bf16 %v1577, %v1577
    %s1579 = scalar_lea.vmem %s6, 16
    %v1580 = vld [vmem:[%s1579] sm:$0xf]
    %v1581 = vld [vmem:[%s1579 + $0x4] sm:$0xf]
    %v1582 = vld [vmem:[%s1579 + $0x8] sm:$0xf]
    %v1583 = vld [vmem:[%s1579 + $0xc] sm:$0xf]
    %v1584 = vld [vmem:[%s7 + $0x3] sm:$0x1]
    %v1585 = vperm.slane %v1584, 0
    %v1590 = vunpack.c.l.b16 %v1580
    %v1591 = vunpack.c.l.b16 %v1581
    %v1592 = vunpack.c.l.b16 %v1582
    %v1593 = vunpack.c.l.b16 %v1583
    %v1594 = vpack.c.b16 %v1591, %v1590
    %v1595 = vpack.c.b16 %v1593, %v1592
    %v1599 = vsel %vm35, %v1578, 0
    %1601 = vmatpush.bf16.msra.mxu0 0
    %1602 = vmatpush.bf16.msra.mxu0 0
    %1603 = vmatpush.bf16.msra.mxu0 0
    %1604 = vmatpush.bf16.msra.mxu0 0
    %1605 = vmatpush.bf16.msra.mxu0 0
    %1606 = vmatpush.bf16.msra.mxu0 0
    %1607 = vmatpush.bf16.msra.mxu0 %v1595
    %1608 = vmatpush.bf16.msra.mxu0 %v1594
    %1609 = vmatmul.bf16.gmra.mxu0 %v1599
    %v1610 = vpop.f32.mrf.mxu0
    %v1611 = vadd.f32 %v1585, %v1610
    %v1612 = vpop.f32.mrf.mxu0
    %1613 = vdwg.mxu0
    %1614 = vst [vmem:[#allocation2] sm:$0x3] %v1611
    // Predicated region
    $region34: #{tpu_custom_call.1} parent=1 // pred_check
      _
    $region35: #{tpu_custom_call.1} parent=1 // pred_check_branch
      %1616 = sbr.rel (0) target = $region37
    $region36: #{tpu_custom_call.1} parent=1 // pred_region
      %1618 = vsyncadd [#allocation3], 0
      %s1620 = sshll.u32 [#allocation2], 4
      %s1621 = int_to_ptr.vmem [resolvable:$true] %s1620
      %s1622 = sshll.u32 %s8, 4
      %s1623 = int_to_ptr.hbm [resolvable:$true] %s1622
      %1625 = dma.vmem_to_hbm [thread:$0]  %s1621, 32, %s1623, [#allocation3]
    $region37: #{tpu_custom_call.1} parent=1 // pred_fallthru
      _
    // Predicated region
    $region38: #{tpu_custom_call.1} parent=1 // pred_check
      _
    $region39: #{tpu_custom_call.1} parent=1 // pred_check_branch
      %1627 = sbr.rel (0) target = $region41
    $region40: #{tpu_custom_call.1} parent=1 // pred_region
      %1629 = dma.done [#allocation3], 32
    $region41: #{tpu_custom_call.1} parent=1 // pred_fallthru
      _
    %1630 = vsyncpa [#allocation3], 1

</llo_original>
